<compile_context>
chip_gen: v6e
topology: v6e:2x2x1
jax: 0.10.0
libtpu: 0.0.40
codegen_flags: <defaults>
</compile_context>

<pallas_src>
import functools
import math

import jax
import jax.numpy as jnp
from jax.experimental import pallas as pl
from jax.experimental.pallas import tpu as pltpu

# ----------------------------- configuration -------------------------------
B = 2                  # numV (videos / batch)
S = 8                  # frs (frames / sequence length)
INPUT_SIZE = 24        # input feature size
ATT_SIZE = 32          # attention_size (== zlength so downstream linears line up)
ZLENGTH = 32           # zlength (feed-forward dim and latent dim)
NUM_CLASSES = 6
NMAP = 9               # number of saliency maps
GAZE_H, GAZE_W = 8, 8  # gazeMapSize
TEMPORAL_HORIZON = 0
PE_SCALE_INIT = 1e-5
MAX_LEN = 128

# Row indices of the packed (NUM_VEC_ROWS, D) bias / LayerNorm table.
(ROW_EMB_B, ROW_BQ, ROW_BK, ROW_BV, ROW_BO,
 ROW_LN1G, ROW_LN1B, ROW_B1, ROW_B2, ROW_LN2G, ROW_LN2B,
 ROW_ENCG, ROW_ENCB, ROW_HEADB) = range(14)
NUM_VEC_ROWS = 14


# ----------------------------- small helpers -------------------------------
def make_positional_encoding(max_len, d_model):
    pos = jnp.arange(max_len, dtype=jnp.float32)[:, None]
    div = jnp.exp(jnp.arange(0, d_model, 2, dtype=jnp.float32)
                  * (-math.log(10000.0) / d_model))
    pe = jnp.zeros((max_len, d_model), jnp.float32)
    pe = pe.at[:, 0::2].set(jnp.sin(pos * div))
    pe = pe.at[:, 1::2].set(jnp.cos(pos * div))
    return pe


def make_attn_mask(seq_len, horizon):
    # torch: mask[i, max(i-horizon,0):i+1] = 1 ; mask = log(mask)  -> 0 / -inf
    i = jnp.arange(seq_len)[:, None]
    j = jnp.arange(seq_len)[None, :]
    valid = (j >= jnp.maximum(i - horizon, 0)) & (j <= i)
    return jnp.where(valid, 0.0, -jnp.inf).astype(jnp.float32)


# ----------------------------- fused Pallas kernel ---------------------------
def _amtgaf_fused_kernel(x_ref, smaps_ref, pe_ref, scal_ref,
                         emb_w_ref, w_qkv_ref, wo_ref, w1_ref, w2_ref,
                         head_w_ref, gaze_w_ref, vec_ref, *rest,
                         horizon, B, S, D, nMap, HW, W, H, n_cls):
    """Entire AMTGAF forward; everything lives in VMEM, invoked once (no grid)."""
    if horizon > 0:
        mask_ref, act_ref, fix_ref, iw_ref = rest
    else:
        act_ref, fix_ref, iw_ref = rest

    f32 = jnp.float32

    def vrow(i):                                  # (1, D) row of packed bias table
        return vec_ref[i:i + 1, :]

    def layer_norm(x, g, b, eps=1e-5):
        mu = jnp.mean(x, axis=-1, keepdims=True)
        var = jnp.mean((x - mu) ** 2, axis=-1, keepdims=True)
        return (x - mu) * jax.lax.rsqrt(var + eps) * g + b

    # ---- linear embedding + scaled positional encoding ----------------------
    x_in = x_ref[...].astype(f32)                                       # (BS, Fin)
    x = jnp.dot(x_in, emb_w_ref[...], preferred_element_type=f32) + vrow(ROW_EMB_B)
    pe = jnp.concatenate([pe_ref[...]] * B, axis=0)                     # (BS, D)
    x = x + scal_ref[0] * pe

    # ---- transformer encoder layer (depth=1, nhead=1, post-LN, ReLU FFN) ----
    qkv = jnp.dot(x, w_qkv_ref[...], preferred_element_type=f32)        # (BS, 3D)
    v = qkv[:, 2 * D:3 * D] + vrow(ROW_BV)
    if horizon > 0:
        # generic masked single-head attention
        q = qkv[:, 0 * D:1 * D] + vrow(ROW_BQ)
        k = qkv[:, 1 * D:2 * D] + vrow(ROW_BK)
        qb = q.reshape(B, S, D) * (1.0 / math.sqrt(D))
        kb = k.reshape(B, S, D)
        vb = v.reshape(B, S, D)
        scores = jnp.einsum("bqd,bkd->bqk", qb, kb,
                            preferred_element_type=f32) + mask_ref[...]
        scores = scores - jnp.max(scores, axis=-1, keepdims=True)
        p = jnp.exp(scores)
        attn = p / jnp.sum(p, axis=-1, keepdims=True)
        ctx = jnp.einsum("bqk,bkd->bqd", attn, vb,
                         preferred_element_type=f32).reshape(B * S, D)
    else:
        # horizon == 0: mask keeps only the diagonal -> softmax is a one-hot
        # identity and the attention output equals the V projection (exact).
        ctx = v

    sa = jnp.dot(ctx, wo_ref[...], preferred_element_type=f32) + vrow(ROW_BO)
    h = layer_norm(x + sa, vrow(ROW_LN1G), vrow(ROW_LN1B))
    ff = jnp.maximum(
        jnp.dot(h, w1_ref[...], preferred_element_type=f32) + vrow(ROW_B1), 0.0)
    ff = jnp.dot(ff, w2_ref[...], preferred_element_type=f32) + vrow(ROW_B2)
    h = layer_norm(h + ff, vrow(ROW_LN2G), vrow(ROW_LN2B))
    z = layer_norm(h, vrow(ROW_ENCG), vrow(ROW_ENCB))                   # encoder norm

    # ---- fused map-weight + action heads (one matmul, sliced in-register) ---
    n_head = nMap + n_cls
    head = (jnp.dot(z, head_w_ref[...], preferred_element_type=f32)
            + vec_ref[ROW_HEADB:ROW_HEADB + 1, 0:n_head])               # (BS, nMap+n_cls)
    act_ref[...] = head[:, nMap:n_head]                                 # action scores

    logits = head[:, 0:nMap]
    logits = logits - jnp.max(logits, axis=-1, keepdims=True)
    e = jnp.exp(logits)
    map_w = e / jnp.sum(e, axis=-1, keepdims=True)                      # (BS, nMap)

    # ---- InstanceNorm2d(1) over (nMap*HW) per (b,s) + weighted map fusion ---
    sm = smaps_ref[...].astype(f32)                                     # (BS, nMap, HW)
    mu = jnp.mean(jnp.mean(sm, axis=2, keepdims=True), axis=1, keepdims=True)
    dev = sm - mu
    var = jnp.mean(jnp.mean(dev * dev, axis=2, keepdims=True), axis=1, keepdims=True)
    sm_n = dev * jax.lax.rsqrt(var + 1e-5) * scal_ref[1] + scal_ref[2]
    fix_maps = sm_n * map_w[:, :, None]                                 # (BS, nMap, HW)
    fix_sum = jnp.sum(fix_maps, axis=1)                                 # (BS, HW)

    # ---- gaze head -----------------------------------------------------------
    gaze = (jnp.dot(fix_sum, gaze_w_ref[...], preferred_element_type=f32)
            + vec_ref[ROW_HEADB:ROW_HEADB + 1, n_head:n_head + 2])      # (BS, 2)
    fixation = jnp.clip(gaze, -1.0, 1.0)
    fix_ref[...] = fixation

    # ---- interpretable weights via in-kernel one-hot gather ------------------
    xi = ((fixation[:, 0:1] + 0.999999) * (0.5 * W)).astype(jnp.int32)  # x index
    yi = ((fixation[:, 1:2] + 0.999999) * (0.5 * H)).astype(jnp.int32)  # y index
    flat_idx = yi * W + xi                                              # (BS, 1)
    lane = jax.lax.broadcasted_iota(jnp.int32, (B * S, HW), 1)
    onehot = (lane == flat_idx).astype(f32)                             # (BS, HW)
    # torch: i_fixmap[:, arange(frs), :, y, x][:, :, 0, :]  -> batch 0's maps,
    # gathered with every batch element's own fixation indices.
    maps_b0 = jnp.concatenate([fix_maps[0:S]] * B, axis=0)              # (BS, nMap, HW)
    iw = jnp.sum(maps_b0 * onehot[:, None, :], axis=-1)                 # (BS, nMap)
    iw_ref[...] = iw - jnp.min(iw)                                      # global min


# ----------------------------- parameter init --------------------------------
def init_params(key):
    D, F = ATT_SIZE, ZLENGTH
    keys = iter(jax.random.split(key, 40))

    def nrm(shape, std=0.1):
        return (std * jax.random.normal(next(keys), shape)).astype(jnp.float32)

    layer = {
        "wq": nrm((D, D)), "wk": nrm((D, D)), "wv": nrm((D, D)),
        "bq": nrm((D,)), "bk": nrm((D,)), "bv": nrm((D,)),
        "wo": nrm((D, D)), "bo": nrm((D,)),
        "ln1_g": jnp.ones((D,), jnp.float32), "ln1_b": jnp.zeros((D,), jnp.float32),
        "w1": nrm((D, F)), "b1": nrm((F,)),
        "w2": nrm((F, D)), "b2": nrm((D,)),
        "ln2_g": jnp.ones((D,), jnp.float32), "ln2_b": jnp.zeros((D,), jnp.float32),
    }
    params = {
        # TransformerEncoder
        "emb_w": nrm((INPUT_SIZE, D)), "emb_b": nrm((D,)),
        "pe": make_positional_encoding(MAX_LEN, D),
        "pe_scale": jnp.full((1,), PE_SCALE_INIT, jnp.float32),
        "layers": [layer],                                   # depth = 1
        "enc_norm_g": jnp.ones((D,), jnp.float32),
        "enc_norm_b": jnp.zeros((D,), jnp.float32),
        # MultiTaskModel heads
        "wmap_w": nrm((ZLENGTH, NMAP)), "wmap_b": nrm((NMAP,)),
        "in_g": jnp.ones((1,), jnp.float32),                 # InstanceNorm2d affine
        "in_b": jnp.zeros((1,), jnp.float32),
        "gaze_w": nrm((GAZE_H * GAZE_W, 2)), "gaze_b": nrm((2,)),
        "act_w": nrm((ZLENGTH, NUM_CLASSES)),                # normal(std=0.1)
        "act_b": jnp.zeros((NUM_CLASSES,), jnp.float32),     # constant 0
    }
    return params


# ----------------------------- forward pass -----------------------------------
def amtgaf_forward(params, inputs, smaps):
    Bb, Ss, Fin = inputs.shape
    _, _, nM, H, W = smaps.shape
    HW = H * W
    D = params["emb_w"].shape[1]
    n_cls = params["act_w"].shape[1]
    lp = params["layers"][0]                                 # depth == 1
    assert lp["b1"].shape[0] == D and nM + n_cls + 2 <= D

    # ---- parameter packing (tiny XLA prep, fused into the same jitted program)
    x2d = inputs.reshape(Bb * Ss, Fin)
    smaps2 = smaps.reshape(Bb * Ss, nM, HW)
    pe_s = params["pe"][:Ss].astype(jnp.float32)
    scalars = jnp.concatenate(
        [params["pe_scale"], params["in_g"], params["in_b"]]).astype(jnp.float32)

    w_qkv = jnp.concatenate([lp["wq"], lp["wk"], lp["wv"]], axis=1)          # (D, 3D)
    head_w = jnp.concatenate([params["wmap_w"], params["act_w"]], axis=1)    # (D, nM+n_cls)
    head_b_row = jnp.concatenate(
        [params["wmap_b"], params["act_b"], params["gaze_b"],
         jnp.zeros((D - nM - n_cls - 2,), jnp.float32)])                     # (D,)
    vec_pack = jnp.stack(
        [params["emb_b"], lp["bq"], lp["bk"], lp["bv"], lp["bo"],
         lp["ln1_g"], lp["ln1_b"], lp["b1"], lp["b2"],
         lp["ln2_g"], lp["ln2_b"],
         params["enc_norm_g"], params["enc_norm_b"], head_b_row], axis=0)    # (14, D)

    vmem = pl.BlockSpec(memory_space=pltpu.MemorySpace.VMEM)
    smem = pl.BlockSpec(memory_space=pltpu.MemorySpace.SMEM)

    args = [x2d, smaps2, pe_s, scalars,
            params["emb_w"], w_qkv, lp["wo"], lp["w1"], lp["w2"],
            head_w, params["gaze_w"], vec_pack]
    in_specs = [vmem, vmem, vmem, smem] + [vmem] * 8
    if TEMPORAL_HORIZON > 0:
        args.append(make_attn_mask(Ss, TEMPORAL_HORIZON))
        in_specs.append(vmem)

    kernel = functools.partial(
        _amtgaf_fused_kernel, horizon=TEMPORAL_HORIZON,
        B=Bb, S=Ss, D=D, nMap=nM, HW=HW, W=W, H=H, n_cls=n_cls)

    act, fixation, iw = pl.pallas_call(
        kernel,
        out_shape=(jax.ShapeDtypeStruct((Bb * Ss, n_cls), jnp.float32),
                   jax.ShapeDtypeStruct((Bb * Ss, 2), jnp.float32),
                   jax.ShapeDtypeStruct((Bb * Ss, nM), jnp.float32)),
        in_specs=in_specs,
        out_specs=(vmem, vmem, vmem),
    )(*args)

    return {"act_preds": act.reshape(Bb, Ss, n_cls),
            "fixations": fixation.reshape(Bb, Ss, 2),
            "interpretable_w": iw.reshape(Bb, Ss, nM)}


# ----------------------------- main --------------------------------------------
if __name__ == "__main__":
    key = jax.random.PRNGKey(0)
    kp, ki, ks = jax.random.split(key, 3)
    params = init_params(kp)

    inputs = jax.random.normal(ki, (B, S, INPUT_SIZE), jnp.float32)
    smaps = jax.random.normal(ks, (B, S, NMAP, GAZE_H, GAZE_W), jnp.float32)

    fwd = jax.jit(amtgaf_forward)
    out = fwd(params, inputs, smaps)
    out = jax.tree_util.tree_map(jax.block_until_ready, out)

    assert out["act_preds"].shape == (B, S, NUM_CLASSES)
    assert out["fixations"].shape == (B, S, 2)
    assert out["interpretable_w"].shape == (B, S, NMAP)
    assert all(bool(jnp.all(jnp.isfinite(v))) for v in out.values())
    print("KERNEL_OK")
</pallas_src>

<mosaic_0001>
module attributes {stable_mosaic.version = 11 : i64} {
  func.func @_amtgaf_fused_kernel(%arg0: memref<16x24xf32, #tpu.memory_space<vmem>>, %arg1: memref<16x9x64xf32, #tpu.memory_space<vmem>>, %arg2: memref<8x32xf32, #tpu.memory_space<vmem>>, %arg3: memref<3xf32, #tpu.memory_space<smem>>, %arg4: memref<24x32xf32, #tpu.memory_space<vmem>>, %arg5: memref<32x96xf32, #tpu.memory_space<vmem>>, %arg6: memref<32x32xf32, #tpu.memory_space<vmem>>, %arg7: memref<32x32xf32, #tpu.memory_space<vmem>>, %arg8: memref<32x32xf32, #tpu.memory_space<vmem>>, %arg9: memref<32x15xf32, #tpu.memory_space<vmem>>, %arg10: memref<64x2xf32, #tpu.memory_space<vmem>>, %arg11: memref<14x32xf32, #tpu.memory_space<vmem>>, %arg12: memref<16x6xf32, #tpu.memory_space<vmem>>, %arg13: memref<16x2xf32, #tpu.memory_space<vmem>>, %arg14: memref<16x9xf32, #tpu.memory_space<vmem>>) attributes {dimension_semantics = [], scalar_prefetch = 0 : i64, scratch_operands = 0 : i64, tpu.core_type = #tpu.core_type<tc>} {
    %c0 = arith.constant 0 : index
    %c0_0 = arith.constant 0 : index
    %0 = vector.load %arg0[%c0, %c0_0] : memref<16x24xf32, #tpu.memory_space<vmem>>, vector<16x24xf32>
    %c0_1 = arith.constant 0 : index
    %c0_2 = arith.constant 0 : index
    %1 = vector.load %arg4[%c0_1, %c0_2] : memref<24x32xf32, #tpu.memory_space<vmem>>, vector<24x32xf32>
    %cst = arith.constant dense<0.000000e+00> : vector<16x32xf32>
    %2 = tpu.matmul %0, %1, %cst {dimension_numbers = #tpu.dot_dimension_numbers<[1], [0], [0], [1], [0, 0, 1, 1], [], []>} : vector<16x24xf32>, vector<24x32xf32>, vector<16x32xf32> -> vector<16x32xf32>
    %c0_3 = arith.constant 0 : index
    %c0_4 = arith.constant 0 : index
    %3 = vector.load %arg11[%c0_3, %c0_4] : memref<14x32xf32, #tpu.memory_space<vmem>>, vector<1x32xf32>
    %4 = vector.broadcast %3 : vector<1x32xf32> to vector<16x32xf32>
    %5 = arith.addf %2, %4 : vector<16x32xf32>
    %c0_5 = arith.constant 0 : index
    %c0_6 = arith.constant 0 : index
    %6 = vector.load %arg2[%c0_5, %c0_6] : memref<8x32xf32, #tpu.memory_space<vmem>>, vector<8x32xf32>
    %7 = tpu.concatenate %6, %6 in 0 : vector<8x32xf32>, vector<8x32xf32> -> vector<16x32xf32>
    %c0_7 = arith.constant 0 : index
    %8 = memref.load %arg3[%c0_7] : memref<3xf32, #tpu.memory_space<smem>>
    %9 = vector.broadcast %8 : f32 to vector<16x32xf32>
    %10 = arith.mulf %9, %7 : vector<16x32xf32>
    %11 = arith.addf %5, %10 : vector<16x32xf32>
    %c0_8 = arith.constant 0 : index
    %c0_9 = arith.constant 0 : index
    %12 = vector.load %arg5[%c0_8, %c0_9] : memref<32x96xf32, #tpu.memory_space<vmem>>, vector<32x96xf32>
    %cst_10 = arith.constant dense<0.000000e+00> : vector<16x96xf32>
    %13 = tpu.matmul %11, %12, %cst_10 {dimension_numbers = #tpu.dot_dimension_numbers<[1], [0], [0], [1], [0, 0, 1, 1], [], []>} : vector<16x32xf32>, vector<32x96xf32>, vector<16x96xf32> -> vector<16x96xf32>
    %14 = vector.extract_strided_slice %13 {offsets = [0, 64], sizes = [16, 32], strides = [1, 1]} : vector<16x96xf32> to vector<16x32xf32>
    %c3 = arith.constant 3 : index
    %c0_11 = arith.constant 0 : index
    %15 = vector.load %arg11[%c3, %c0_11] : memref<14x32xf32, #tpu.memory_space<vmem>>, vector<1x32xf32>
    %16 = vector.broadcast %15 : vector<1x32xf32> to vector<16x32xf32>
    %17 = arith.addf %14, %16 : vector<16x32xf32>
    %c0_12 = arith.constant 0 : index
    %c0_13 = arith.constant 0 : index
    %18 = vector.load %arg6[%c0_12, %c0_13] : memref<32x32xf32, #tpu.memory_space<vmem>>, vector<32x32xf32>
    %cst_14 = arith.constant dense<0.000000e+00> : vector<16x32xf32>
    %19 = tpu.matmul %17, %18, %cst_14 {dimension_numbers = #tpu.dot_dimension_numbers<[1], [0], [0], [1], [0, 0, 1, 1], [], []>} : vector<16x32xf32>, vector<32x32xf32>, vector<16x32xf32> -> vector<16x32xf32>
    %c4 = arith.constant 4 : index
    %c0_15 = arith.constant 0 : index
    %20 = vector.load %arg11[%c4, %c0_15] : memref<14x32xf32, #tpu.memory_space<vmem>>, vector<1x32xf32>
    %21 = vector.broadcast %20 : vector<1x32xf32> to vector<16x32xf32>
    %22 = arith.addf %19, %21 : vector<16x32xf32>
    %23 = arith.addf %11, %22 : vector<16x32xf32>
    %c5 = arith.constant 5 : index
    %c0_16 = arith.constant 0 : index
    %24 = vector.load %arg11[%c5, %c0_16] : memref<14x32xf32, #tpu.memory_space<vmem>>, vector<1x32xf32>
    %c6 = arith.constant 6 : index
    %c0_17 = arith.constant 0 : index
    %25 = vector.load %arg11[%c6, %c0_17] : memref<14x32xf32, #tpu.memory_space<vmem>>, vector<1x32xf32>
    %cst_18 = arith.constant dense<0.000000e+00> : vector<16xf32>
    %26 = vector.multi_reduction <add>, %23, %cst_18 [1] : vector<16x32xf32> to vector<16xf32>
    %27 = vector.shape_cast %26 : vector<16xf32> to vector<16x1xf32>
    %cst_19 = arith.constant 3.200000e+01 : f32
    %28 = vector.broadcast %cst_19 : f32 to vector<16x1xf32>
    %29 = arith.divf %27, %28 : vector<16x1xf32>
    %30 = vector.broadcast %29 : vector<16x1xf32> to vector<16x32xf32>
    %31 = arith.subf %23, %30 : vector<16x32xf32>
    %32 = arith.mulf %31, %31 : vector<16x32xf32>
    %cst_20 = arith.constant dense<0.000000e+00> : vector<16xf32>
    %33 = vector.multi_reduction <add>, %32, %cst_20 [1] : vector<16x32xf32> to vector<16xf32>
    %34 = vector.shape_cast %33 : vector<16xf32> to vector<16x1xf32>
    %cst_21 = arith.constant 3.200000e+01 : f32
    %35 = vector.broadcast %cst_21 : f32 to vector<16x1xf32>
    %36 = arith.divf %34, %35 : vector<16x1xf32>
    %37 = vector.broadcast %29 : vector<16x1xf32> to vector<16x32xf32>
    %38 = arith.subf %23, %37 : vector<16x32xf32>
    %cst_22 = arith.constant 9.99999974E-6 : f32
    %39 = vector.broadcast %cst_22 : f32 to vector<16x1xf32>
    %40 = arith.addf %36, %39 : vector<16x1xf32>
    %41 = math.rsqrt %40 : vector<16x1xf32>
    %42 = vector.broadcast %41 : vector<16x1xf32> to vector<16x32xf32>
    %43 = arith.mulf %38, %42 : vector<16x32xf32>
    %44 = vector.broadcast %24 : vector<1x32xf32> to vector<16x32xf32>
    %45 = arith.mulf %43, %44 : vector<16x32xf32>
    %46 = vector.broadcast %25 : vector<1x32xf32> to vector<16x32xf32>
    %47 = arith.addf %45, %46 : vector<16x32xf32>
    %c0_23 = arith.constant 0 : index
    %c0_24 = arith.constant 0 : index
    %48 = vector.load %arg7[%c0_23, %c0_24] : memref<32x32xf32, #tpu.memory_space<vmem>>, vector<32x32xf32>
    %cst_25 = arith.constant dense<0.000000e+00> : vector<16x32xf32>
    %49 = tpu.matmul %47, %48, %cst_25 {dimension_numbers = #tpu.dot_dimension_numbers<[1], [0], [0], [1], [0, 0, 1, 1], [], []>} : vector<16x32xf32>, vector<32x32xf32>, vector<16x32xf32> -> vector<16x32xf32>
    %c7 = arith.constant 7 : index
    %c0_26 = arith.constant 0 : index
    %50 = vector.load %arg11[%c7, %c0_26] : memref<14x32xf32, #tpu.memory_space<vmem>>, vector<1x32xf32>
    %51 = vector.broadcast %50 : vector<1x32xf32> to vector<16x32xf32>
    %52 = arith.addf %49, %51 : vector<16x32xf32>
    %cst_27 = arith.constant 0.000000e+00 : f32
    %53 = vector.broadcast %cst_27 : f32 to vector<16x32xf32>
    %54 = arith.maximumf %52, %53 : vector<16x32xf32>
    %c0_28 = arith.constant 0 : index
    %c0_29 = arith.constant 0 : index
    %55 = vector.load %arg8[%c0_28, %c0_29] : memref<32x32xf32, #tpu.memory_space<vmem>>, vector<32x32xf32>
    %cst_30 = arith.constant dense<0.000000e+00> : vector<16x32xf32>
    %56 = tpu.matmul %54, %55, %cst_30 {dimension_numbers = #tpu.dot_dimension_numbers<[1], [0], [0], [1], [0, 0, 1, 1], [], []>} : vector<16x32xf32>, vector<32x32xf32>, vector<16x32xf32> -> vector<16x32xf32>
    %c8 = arith.constant 8 : index
    %c0_31 = arith.constant 0 : index
    %57 = vector.load %arg11[%c8, %c0_31] : memref<14x32xf32, #tpu.memory_space<vmem>>, vector<1x32xf32>
    %58 = vector.broadcast %57 : vector<1x32xf32> to vector<16x32xf32>
    %59 = arith.addf %56, %58 : vector<16x32xf32>
    %60 = arith.addf %47, %59 : vector<16x32xf32>
    %c9 = arith.constant 9 : index
    %c0_32 = arith.constant 0 : index
    %61 = vector.load %arg11[%c9, %c0_32] : memref<14x32xf32, #tpu.memory_space<vmem>>, vector<1x32xf32>
    %c10 = arith.constant 10 : index
    %c0_33 = arith.constant 0 : index
    %62 = vector.load %arg11[%c10, %c0_33] : memref<14x32xf32, #tpu.memory_space<vmem>>, vector<1x32xf32>
    %cst_34 = arith.constant dense<0.000000e+00> : vector<16xf32>
    %63 = vector.multi_reduction <add>, %60, %cst_34 [1] : vector<16x32xf32> to vector<16xf32>
    %64 = vector.shape_cast %63 : vector<16xf32> to vector<16x1xf32>
    %cst_35 = arith.constant 3.200000e+01 : f32
    %65 = vector.broadcast %cst_35 : f32 to vector<16x1xf32>
    %66 = arith.divf %64, %65 : vector<16x1xf32>
    %67 = vector.broadcast %66 : vector<16x1xf32> to vector<16x32xf32>
    %68 = arith.subf %60, %67 : vector<16x32xf32>
    %69 = arith.mulf %68, %68 : vector<16x32xf32>
    %cst_36 = arith.constant dense<0.000000e+00> : vector<16xf32>
    %70 = vector.multi_reduction <add>, %69, %cst_36 [1] : vector<16x32xf32> to vector<16xf32>
    %71 = vector.shape_cast %70 : vector<16xf32> to vector<16x1xf32>
    %cst_37 = arith.constant 3.200000e+01 : f32
    %72 = vector.broadcast %cst_37 : f32 to vector<16x1xf32>
    %73 = arith.divf %71, %72 : vector<16x1xf32>
    %74 = vector.broadcast %66 : vector<16x1xf32> to vector<16x32xf32>
    %75 = arith.subf %60, %74 : vector<16x32xf32>
    %cst_38 = arith.constant 9.99999974E-6 : f32
    %76 = vector.broadcast %cst_38 : f32 to vector<16x1xf32>
    %77 = arith.addf %73, %76 : vector<16x1xf32>
    %78 = math.rsqrt %77 : vector<16x1xf32>
    %79 = vector.broadcast %78 : vector<16x1xf32> to vector<16x32xf32>
    %80 = arith.mulf %75, %79 : vector<16x32xf32>
    %81 = vector.broadcast %61 : vector<1x32xf32> to vector<16x32xf32>
    %82 = arith.mulf %80, %81 : vector<16x32xf32>
    %83 = vector.broadcast %62 : vector<1x32xf32> to vector<16x32xf32>
    %84 = arith.addf %82, %83 : vector<16x32xf32>
    %c11 = arith.constant 11 : index
    %c0_39 = arith.constant 0 : index
    %85 = vector.load %arg11[%c11, %c0_39] : memref<14x32xf32, #tpu.memory_space<vmem>>, vector<1x32xf32>
    %c12 = arith.constant 12 : index
    %c0_40 = arith.constant 0 : index
    %86 = vector.load %arg11[%c12, %c0_40] : memref<14x32xf32, #tpu.memory_space<vmem>>, vector<1x32xf32>
    %cst_41 = arith.constant dense<0.000000e+00> : vector<16xf32>
    %87 = vector.multi_reduction <add>, %84, %cst_41 [1] : vector<16x32xf32> to vector<16xf32>
    %88 = vector.shape_cast %87 : vector<16xf32> to vector<16x1xf32>
    %cst_42 = arith.constant 3.200000e+01 : f32
    %89 = vector.broadcast %cst_42 : f32 to vector<16x1xf32>
    %90 = arith.divf %88, %89 : vector<16x1xf32>
    %91 = vector.broadcast %90 : vector<16x1xf32> to vector<16x32xf32>
    %92 = arith.subf %84, %91 : vector<16x32xf32>
    %93 = arith.mulf %92, %92 : vector<16x32xf32>
    %cst_43 = arith.constant dense<0.000000e+00> : vector<16xf32>
    %94 = vector.multi_reduction <add>, %93, %cst_43 [1] : vector<16x32xf32> to vector<16xf32>
    %95 = vector.shape_cast %94 : vector<16xf32> to vector<16x1xf32>
    %cst_44 = arith.constant 3.200000e+01 : f32
    %96 = vector.broadcast %cst_44 : f32 to vector<16x1xf32>
    %97 = arith.divf %95, %96 : vector<16x1xf32>
    %98 = vector.broadcast %90 : vector<16x1xf32> to vector<16x32xf32>
    %99 = arith.subf %84, %98 : vector<16x32xf32>
    %cst_45 = arith.constant 9.99999974E-6 : f32
    %100 = vector.broadcast %cst_45 : f32 to vector<16x1xf32>
    %101 = arith.addf %97, %100 : vector<16x1xf32>
    %102 = math.rsqrt %101 : vector<16x1xf32>
    %103 = vector.broadcast %102 : vector<16x1xf32> to vector<16x32xf32>
    %104 = arith.mulf %99, %103 : vector<16x32xf32>
    %105 = vector.broadcast %85 : vector<1x32xf32> to vector<16x32xf32>
    %106 = arith.mulf %104, %105 : vector<16x32xf32>
    %107 = vector.broadcast %86 : vector<1x32xf32> to vector<16x32xf32>
    %108 = arith.addf %106, %107 : vector<16x32xf32>
    %c0_46 = arith.constant 0 : index
    %c0_47 = arith.constant 0 : index
    %109 = vector.load %arg9[%c0_46, %c0_47] : memref<32x15xf32, #tpu.memory_space<vmem>>, vector<32x15xf32>
    %cst_48 = arith.constant dense<0.000000e+00> : vector<16x15xf32>
    %110 = tpu.matmul %108, %109, %cst_48 {dimension_numbers = #tpu.dot_dimension_numbers<[1], [0], [0], [1], [0, 0, 1, 1], [], []>} : vector<16x32xf32>, vector<32x15xf32>, vector<16x15xf32> -> vector<16x15xf32>
    %c13 = arith.constant 13 : index
    %c0_49 = arith.constant 0 : index
    %111 = vector.load %arg11[%c13, %c0_49] : memref<14x32xf32, #tpu.memory_space<vmem>>, vector<1x15xf32>
    %112 = vector.broadcast %111 : vector<1x15xf32> to vector<16x15xf32>
    %113 = arith.addf %110, %112 : vector<16x15xf32>
    %114 = vector.extract_strided_slice %113 {offsets = [0, 9], sizes = [16, 6], strides = [1, 1]} : vector<16x15xf32> to vector<16x6xf32>
    %c0_50 = arith.constant 0 : index
    %c0_51 = arith.constant 0 : index
    %115 = vector.load %arg12[%c0_50, %c0_51] : memref<16x6xf32, #tpu.memory_space<vmem>>, vector<16x6xf32>
    tpu.vector_store %arg12[%c0_50, %c0_51], %114 {strides = array<i32>} : memref<16x6xf32, #tpu.memory_space<vmem>>, vector<16x6xf32>,
    %116 = vector.extract_strided_slice %113 {offsets = [0, 0], sizes = [16, 9], strides = [1, 1]} : vector<16x15xf32> to vector<16x9xf32>
    %cst_52 = arith.constant dense<0xFF800000> : vector<16xf32>
    %117 = vector.multi_reduction <maximumf>, %116, %cst_52 [1] : vector<16x9xf32> to vector<16xf32>
    %118 = vector.shape_cast %117 : vector<16xf32> to vector<16x1xf32>
    %119 = vector.broadcast %118 : vector<16x1xf32> to vector<16x9xf32>
    %120 = arith.subf %116, %119 : vector<16x9xf32>
    %121 = math.exp %120 : vector<16x9xf32>
    %cst_53 = arith.constant dense<0.000000e+00> : vector<16xf32>
    %122 = vector.multi_reduction <add>, %121, %cst_53 [1] : vector<16x9xf32> to vector<16xf32>
    %123 = vector.shape_cast %122 : vector<16xf32> to vector<16x1xf32>
    %124 = vector.broadcast %123 : vector<16x1xf32> to vector<16x9xf32>
    %125 = arith.divf %121, %124 : vector<16x9xf32>
    %c0_54 = arith.constant 0 : index
    %c0_55 = arith.constant 0 : index
    %c0_56 = arith.constant 0 : index
    %126 = vector.load %arg1[%c0_54, %c0_55, %c0_56] : memref<16x9x64xf32, #tpu.memory_space<vmem>>, vector<16x9x64xf32>
    %cst_57 = arith.constant dense<0.000000e+00> : vector<16x9xf32>
    %127 = vector.multi_reduction <add>, %126, %cst_57 [2] : vector<16x9x64xf32> to vector<16x9xf32>
    %128 = vector.shape_cast %127 : vector<16x9xf32> to vector<16x9x1xf32>
    %cst_58 = arith.constant 6.400000e+01 : f32
    %129 = vector.broadcast %cst_58 : f32 to vector<16x9x1xf32>
    %130 = arith.divf %128, %129 : vector<16x9x1xf32>
    %cst_59 = arith.constant dense<0.000000e+00> : vector<16x1xf32>
    %131 = vector.multi_reduction <add>, %130, %cst_59 [1] : vector<16x9x1xf32> to vector<16x1xf32>
    %132 = vector.shape_cast %131 : vector<16x1xf32> to vector<16x1x1xf32>
    %cst_60 = arith.constant 9.000000e+00 : f32
    %133 = vector.broadcast %cst_60 : f32 to vector<16x1x1xf32>
    %134 = arith.divf %132, %133 : vector<16x1x1xf32>
    %135 = vector.broadcast %134 : vector<16x1x1xf32> to vector<16x9x64xf32>
    %136 = arith.subf %126, %135 : vector<16x9x64xf32>
    %137 = arith.mulf %136, %136 : vector<16x9x64xf32>
    %cst_61 = arith.constant dense<0.000000e+00> : vector<16x9xf32>
    %138 = vector.multi_reduction <add>, %137, %cst_61 [2] : vector<16x9x64xf32> to vector<16x9xf32>
    %139 = vector.shape_cast %138 : vector<16x9xf32> to vector<16x9x1xf32>
    %cst_62 = arith.constant 6.400000e+01 : f32
    %140 = vector.broadcast %cst_62 : f32 to vector<16x9x1xf32>
    %141 = arith.divf %139, %140 : vector<16x9x1xf32>
    %cst_63 = arith.constant dense<0.000000e+00> : vector<16x1xf32>
    %142 = vector.multi_reduction <add>, %141, %cst_63 [1] : vector<16x9x1xf32> to vector<16x1xf32>
    %143 = vector.shape_cast %142 : vector<16x1xf32> to vector<16x1x1xf32>
    %cst_64 = arith.constant 9.000000e+00 : f32
    %144 = vector.broadcast %cst_64 : f32 to vector<16x1x1xf32>
    %145 = arith.divf %143, %144 : vector<16x1x1xf32>
    %cst_65 = arith.constant 9.99999974E-6 : f32
    %146 = vector.broadcast %cst_65 : f32 to vector<16x1x1xf32>
    %147 = arith.addf %145, %146 : vector<16x1x1xf32>
    %148 = math.rsqrt %147 : vector<16x1x1xf32>
    %149 = vector.broadcast %148 : vector<16x1x1xf32> to vector<16x9x64xf32>
    %150 = arith.mulf %136, %149 : vector<16x9x64xf32>
    %c1 = arith.constant 1 : index
    %151 = memref.load %arg3[%c1] : memref<3xf32, #tpu.memory_space<smem>>
    %152 = vector.broadcast %151 : f32 to vector<16x9x64xf32>
    %153 = arith.mulf %150, %152 : vector<16x9x64xf32>
    %c2 = arith.constant 2 : index
    %154 = memref.load %arg3[%c2] : memref<3xf32, #tpu.memory_space<smem>>
    %155 = vector.broadcast %154 : f32 to vector<16x9x64xf32>
    %156 = arith.addf %153, %155 : vector<16x9x64xf32>
    %157 = vector.shape_cast %125 : vector<16x9xf32> to vector<16x9x1xf32>
    %158 = vector.broadcast %157 : vector<16x9x1xf32> to vector<16x9x64xf32>
    %159 = arith.mulf %156, %158 : vector<16x9x64xf32>
    %cst_66 = arith.constant dense<0.000000e+00> : vector<16x64xf32>
    %160 = vector.multi_reduction <add>, %159, %cst_66 [1] : vector<16x9x64xf32> to vector<16x64xf32>
    %c0_67 = arith.constant 0 : index
    %c0_68 = arith.constant 0 : index
    %161 = vector.load %arg10[%c0_67, %c0_68] : memref<64x2xf32, #tpu.memory_space<vmem>>, vector<64x2xf32>
    %cst_69 = arith.constant dense<0.000000e+00> : vector<16x2xf32>
    %162 = tpu.matmul %160, %161, %cst_69 {dimension_numbers = #tpu.dot_dimension_numbers<[1], [0], [0], [1], [0, 0, 1, 1], [], []>} : vector<16x64xf32>, vector<64x2xf32>, vector<16x2xf32> -> vector<16x2xf32>
    %c13_70 = arith.constant 13 : index
    %c15 = arith.constant 15 : index
    %163 = vector.load %arg11[%c13_70, %c15] : memref<14x32xf32, #tpu.memory_space<vmem>>, vector<1x2xf32>
    %164 = vector.broadcast %163 : vector<1x2xf32> to vector<16x2xf32>
    %165 = arith.addf %162, %164 : vector<16x2xf32>
    %cst_71 = arith.constant -1.000000e+00 : f32
    %cst_72 = arith.constant 1.000000e+00 : f32
    %166 = vector.broadcast %cst_71 : f32 to vector<16x2xf32>
    %167 = arith.maximumf %166, %165 : vector<16x2xf32>
    %168 = vector.broadcast %cst_72 : f32 to vector<16x2xf32>
    %169 = arith.minimumf %168, %167 : vector<16x2xf32>
    %c0_73 = arith.constant 0 : index
    %c0_74 = arith.constant 0 : index
    %170 = vector.load %arg13[%c0_73, %c0_74] : memref<16x2xf32, #tpu.memory_space<vmem>>, vector<16x2xf32>
    tpu.vector_store %arg13[%c0_73, %c0_74], %169 {strides = array<i32>} : memref<16x2xf32, #tpu.memory_space<vmem>>, vector<16x2xf32>,
    %171 = vector.extract_strided_slice %169 {offsets = [0, 0], sizes = [16, 1], strides = [1, 1]} : vector<16x2xf32> to vector<16x1xf32>
    %cst_75 = arith.constant 0.999998986 : f32
    %172 = vector.broadcast %cst_75 : f32 to vector<16x1xf32>
    %173 = arith.addf %171, %172 : vector<16x1xf32>
    %cst_76 = arith.constant 4.000000e+00 : f32
    %174 = vector.broadcast %cst_76 : f32 to vector<16x1xf32>
    %175 = arith.mulf %173, %174 : vector<16x1xf32>
    %176 = arith.fptosi %175 : vector<16x1xf32> to vector<16x1xi32>
    %177 = vector.extract_strided_slice %169 {offsets = [0, 1], sizes = [16, 1], strides = [1, 1]} : vector<16x2xf32> to vector<16x1xf32>
    %cst_77 = arith.constant 0.999998986 : f32
    %178 = vector.broadcast %cst_77 : f32 to vector<16x1xf32>
    %179 = arith.addf %177, %178 : vector<16x1xf32>
    %cst_78 = arith.constant 4.000000e+00 : f32
    %180 = vector.broadcast %cst_78 : f32 to vector<16x1xf32>
    %181 = arith.mulf %179, %180 : vector<16x1xf32>
    %182 = arith.fptosi %181 : vector<16x1xf32> to vector<16x1xi32>
    %c8_i32 = arith.constant 8 : i32
    %183 = vector.broadcast %c8_i32 : i32 to vector<16x1xi32>
    %184 = arith.muli %182, %183 : vector<16x1xi32>
    %185 = arith.addi %184, %176 : vector<16x1xi32>
    %186 = tpu.iota {dimensions = array<i32: 1>} : vector<16x64xi32>
    %187 = vector.broadcast %185 : vector<16x1xi32> to vector<16x64xi32>
    %188 = arith.cmpi eq, %186, %187 : vector<16x64xi32>
    %189 = arith.extui %188 : vector<16x64xi1> to vector<16x64xi32>
    %190 = arith.sitofp %189 : vector<16x64xi32> to vector<16x64xf32>
    %191 = vector.extract_strided_slice %159 {offsets = [0, 0, 0], sizes = [8, 9, 64], strides = [1, 1, 1]} : vector<16x9x64xf32> to vector<8x9x64xf32>
    %192 = tpu.concatenate %191, %191 in 0 : vector<8x9x64xf32>, vector<8x9x64xf32> -> vector<16x9x64xf32>
    %193 = vector.shape_cast %190 : vector<16x64xf32> to vector<16x1x64xf32>
    %194 = vector.broadcast %193 : vector<16x1x64xf32> to vector<16x9x64xf32>
    %195 = arith.mulf %192, %194 : vector<16x9x64xf32>
    %cst_79 = arith.constant dense<0.000000e+00> : vector<16x9xf32>
    %196 = vector.multi_reduction <add>, %195, %cst_79 [2] : vector<16x9x64xf32> to vector<16x9xf32>
    %197 = vector.shape_cast %196 : vector<16x9xf32> to vector<1x16x9xf32>
    %cst_80 = arith.constant dense<0x7F800000> : vector<1xf32>
    %198 = vector.multi_reduction <minimumf>, %197, %cst_80 [1, 2] : vector<1x16x9xf32> to vector<1xf32>
    %199 = vector.shape_cast %198 : vector<1xf32> to vector<1x1x1xf32>
    %200 = vector.extract %199[0, 0, 0] : f32 from vector<1x1x1xf32>
    %201 = vector.broadcast %200 : f32 to vector<16x9xf32>
    %202 = arith.subf %196, %201 : vector<16x9xf32>
    %c0_81 = arith.constant 0 : index
    %c0_82 = arith.constant 0 : index
    %203 = vector.load %arg14[%c0_81, %c0_82] : memref<16x9xf32, #tpu.memory_space<vmem>>, vector<16x9xf32>
    tpu.vector_store %arg14[%c0_81, %c0_82], %202 {strides = array<i32>} : memref<16x9xf32, #tpu.memory_space<vmem>>, vector<16x9xf32>,
    return
  }
}

</mosaic_0001>

<llo_original>
// kernel: amtgaf_forward.1
$region0: #{amtgaf_forward.1}
  #allocation0 [shape = 'u32[]', space=smem, size = 0x4, offset = 0x4, fixed_abs, tag = 'smem constant byte address 0x4 - core index']
  #allocation1 [shape = 'u32[144,128]{1,0:T(1,128)}', space=vmem, size = 0x12000, scoped, tag = 'internal scratch']
  %s0 = inlined_call_operand.vmem [shape: f32[16,24], index: 0, kind: input, shape index: {}]
  %s1 = inlined_call_operand.vmem [shape: f32[16,9,64], index: 1, kind: input, shape index: {}]
  %s2 = inlined_call_operand.vmem [shape: f32[8,32], index: 2, kind: input, shape index: {}]
  %s3 = inlined_call_operand.vmem [shape: f32[3], index: 3, kind: input, shape index: {}]
  %s4 = inlined_call_operand.vmem [shape: f32[24,32], index: 4, kind: input, shape index: {}]
  %s5 = inlined_call_operand.vmem [shape: f32[32,96], index: 5, kind: input, shape index: {}]
  %s6 = inlined_call_operand.vmem [shape: f32[32,32], index: 6, kind: input, shape index: {}]
  %s7 = inlined_call_operand.vmem [shape: f32[32,32], index: 7, kind: input, shape index: {}]
  %s8 = inlined_call_operand.vmem [shape: f32[32,32], index: 8, kind: input, shape index: {}]
  %s9 = inlined_call_operand.vmem [shape: f32[32,15], index: 9, kind: input, shape index: {}]
  %s10 = inlined_call_operand.vmem [shape: f32[64,2], index: 10, kind: input, shape index: {}]
  %s11 = inlined_call_operand.vmem [shape: f32[14,32], index: 11, kind: input, shape index: {}]
  %s12 = inlined_call_operand.vmem [shape: f32[16,6], index: 12, kind: output, shape index: {0}]
  %s13 = inlined_call_operand.vmem [shape: f32[16,2], index: 13, kind: output, shape index: {1}]
  %s14 = inlined_call_operand.hbm [shape: f32[16,9], index: 14, kind: output, shape index: {2}]
  %15 = xla_tuple %s12, %s13, %s14
  %s16 = sld [smem:[#allocation0]]
  $region78: #{amtgaf_forward.1} parent=0
    _
  %s18 = ssub.s32 1, %s16
  %s19 = scalar_select 0, %s18, %s16
  $region1: #{amtgaf_forward.1} parent=0
    #allocation2 [shape = 'u8[512]{0}', space=smem, size = 0x200, scoped, tag = 'input window, operand 3, single buffered']
    #allocation3 [shape = 's32[1]{0}', space=sflag, size = 0x4, scoped, tag = 'scoped memory for amtgaf_forward.1']
    #allocation4 [shape = 's32[1]{0}', space=sflag, size = 0x4, scoped, tag = 'scoped memory for amtgaf_forward.1']
    #allocation5 [shape = 'u8[8192]{0}', space=vmem, size = 0x2000, scoped, tag = 'output window, operand 2, single buffered']
    %20 = vsyncpa [#allocation4], 0
    %21 = vsyncpa [#allocation3], 0
    // Predicated region
    $region2: #{amtgaf_forward.1} parent=1 // pred_check
      _
    $region3: #{amtgaf_forward.1} parent=1 // pred_check_branch
      %23 = sbr.rel (0) target = $region5
    $region4: #{amtgaf_forward.1} parent=1 // pred_region
      _
    $region5: #{amtgaf_forward.1} parent=1 // pred_fallthru
      _
    // Predicated region
    $region6: #{amtgaf_forward.1} parent=1 // pred_check
      _
    $region7: #{amtgaf_forward.1} parent=1 // pred_check_branch
      %25 = sbr.rel (0) target = $region9
    $region8: #{amtgaf_forward.1} parent=1 // pred_region
      _
    $region9: #{amtgaf_forward.1} parent=1 // pred_fallthru
      _
    // Predicated region
    $region10: #{amtgaf_forward.1} parent=1 // pred_check
      _
    $region11: #{amtgaf_forward.1} parent=1 // pred_check_branch
      %27 = sbr.rel (0) target = $region13
    $region12: #{amtgaf_forward.1} parent=1 // pred_region
      _
    $region13: #{amtgaf_forward.1} parent=1 // pred_fallthru
      _
    // Predicated region
    $region14: #{amtgaf_forward.1} parent=1 // pred_check
      _
    $region15: #{amtgaf_forward.1} parent=1 // pred_check_branch
      %29 = sbr.rel (0) target = $region17
    $region16: #{amtgaf_forward.1} parent=1 // pred_region
      %s31 = ssub.s32 16, 16
      %32 = vsyncadd [#allocation4], %s31
      %s34 = sshll.u32 %s3, 4
      %s35 = int_to_ptr.vmem [resolvable:$true] %s34
      %37 = dma.vmem_to_smem %s35, 16, [#allocation2], [#allocation4]
    $region17: #{amtgaf_forward.1} parent=1 // pred_fallthru
      _
    // Predicated region
    $region18: #{amtgaf_forward.1} parent=1 // pred_check
      _
    $region19: #{amtgaf_forward.1} parent=1 // pred_check_branch
      %39 = sbr.rel (0) target = $region21
    $region20: #{amtgaf_forward.1} parent=1 // pred_region
      _
    $region21: #{amtgaf_forward.1} parent=1 // pred_fallthru
      _
    // Predicated region
    $region22: #{amtgaf_forward.1} parent=1 // pred_check
      _
    $region23: #{amtgaf_forward.1} parent=1 // pred_check_branch
      %41 = sbr.rel (0) target = $region25
    $region24: #{amtgaf_forward.1} parent=1 // pred_region
      _
    $region25: #{amtgaf_forward.1} parent=1 // pred_fallthru
      _
    // Predicated region
    $region26: #{amtgaf_forward.1} parent=1 // pred_check
      _
    $region27: #{amtgaf_forward.1} parent=1 // pred_check_branch
      %43 = sbr.rel (0) target = $region29
    $region28: #{amtgaf_forward.1} parent=1 // pred_region
      _
    $region29: #{amtgaf_forward.1} parent=1 // pred_fallthru
      _
    // Predicated region
    $region30: #{amtgaf_forward.1} parent=1 // pred_check
      _
    $region31: #{amtgaf_forward.1} parent=1 // pred_check_branch
      %45 = sbr.rel (0) target = $region33
    $region32: #{amtgaf_forward.1} parent=1 // pred_region
      _
    $region33: #{amtgaf_forward.1} parent=1 // pred_fallthru
      _
    // Predicated region
    $region34: #{amtgaf_forward.1} parent=1 // pred_check
      _
    $region35: #{amtgaf_forward.1} parent=1 // pred_check_branch
      %47 = sbr.rel (0) target = $region37
    $region36: #{amtgaf_forward.1} parent=1 // pred_region
      _
    $region37: #{amtgaf_forward.1} parent=1 // pred_fallthru
      _
    // Predicated region
    $region38: #{amtgaf_forward.1} parent=1 // pred_check
      _
    $region39: #{amtgaf_forward.1} parent=1 // pred_check_branch
      %49 = sbr.rel (0) target = $region41
    $region40: #{amtgaf_forward.1} parent=1 // pred_region
      _
    $region41: #{amtgaf_forward.1} parent=1 // pred_fallthru
      _
    // Predicated region
    $region42: #{amtgaf_forward.1} parent=1 // pred_check
      _
    $region43: #{amtgaf_forward.1} parent=1 // pred_check_branch
      %51 = sbr.rel (0) target = $region45
    $region44: #{amtgaf_forward.1} parent=1 // pred_region
      _
    $region45: #{amtgaf_forward.1} parent=1 // pred_fallthru
      _
    // Predicated region
    $region46: #{amtgaf_forward.1} parent=1 // pred_check
      _
    $region47: #{amtgaf_forward.1} parent=1 // pred_check_branch
      %53 = sbr.rel (0) target = $region49
    $region48: #{amtgaf_forward.1} parent=1 // pred_region
      _
    $region49: #{amtgaf_forward.1} parent=1 // pred_fallthru
      _
    // Predicated region
    $region50: #{amtgaf_forward.1} parent=1 // pred_check
      _
    $region51: #{amtgaf_forward.1} parent=1 // pred_check_branch
      %55 = sbr.rel (0) target = $region53
    $region52: #{amtgaf_forward.1} parent=1 // pred_region
      %56 = dma.done [#allocation4], 16
    $region53: #{amtgaf_forward.1} parent=1 // pred_fallthru
      _
    %57 = sfence
    %v58 = vld [vmem:[%s0] sm:$0xff]
    %v59 = vld [vmem:[%s0 + $0x8] sm:$0xff]
    %v60 = vld [vmem:[%s4] sm:$0xff]
    %v61 = vld [vmem:[%s4 + $0x8] sm:$0xff]
    %v62 = vld [vmem:[%s4 + $0x10] sm:$0xff]
    %v63 = vld [vmem:[%s11] sm:$0x1]
    %v64 = vlaneseq
    %v65 = vshrl.u32 %v64, 7
    %v66 = vsub.s32 0, %v65
    %v67 = vrot.slane %v63, %v66
    %vm68 = vcmask 195584
    %v70 = vsel %vm68, %v58, 0
    %v73 = vsel %vm68, %v59, 0
    %75 = vmatprep.subr.mxu0 0.0
    %76 = vmatpush1.msra.mxu0 0.0
    %77 = vmatprep.subr.mxu0 0.0
    %78 = vmatpush1.msra.mxu0 0.0
    %79 = vmatprep.subr.mxu0 0.0
    %80 = vmatpush1.msra.mxu0 0.0
    %81 = vmatprep.subr.mxu0 0.0
    %82 = vmatpush1.msra.mxu0 0.0
    %83 = vmatprep.subr.mxu0 0.0
    %84 = vmatpush1.msra.mxu0 0.0
    %85 = vmatprep.subr.mxu0 0.0
    %86 = vmatpush1.msra.mxu0 0.0
    %87 = vmatprep.subr.mxu0 0.0
    %88 = vmatpush1.msra.mxu0 0.0
    %89 = vmatprep.subr.mxu0 0.0
    %90 = vmatpush1.msra.mxu0 0.0
    %91 = vmatprep.subr.mxu0 0.0
    %92 = vmatpush1.msra.mxu0 0.0
    %93 = vmatprep.subr.mxu0 0.0
    %94 = vmatpush1.msra.mxu0 0.0
    %95 = vmatprep.subr.mxu0 0.0
    %96 = vmatpush1.msra.mxu0 0.0
    %97 = vmatprep.subr.mxu0 0.0
    %98 = vmatpush1.msra.mxu0 0.0
    %99 = vmatprep.subr.mxu0 0.0
    %100 = vmatpush1.msra.mxu0 0.0
    %101 = vmatprep.subr.mxu0 0.0
    %102 = vmatpush1.msra.mxu0 %v62
    %103 = vmatprep.subr.mxu0 0.0
    %104 = vmatpush1.msra.mxu0 %v61
    %105 = vmatprep.subr.mxu0 0.0
    %106 = vmatpush1.msra.mxu0 %v60
    %107 = vmatprep.subr.mxu0 0.0
    %108 = vmatpush2.msra.mxu0 0.0
    %109 = vmatprep.subr.mxu0 0.0
    %110 = vmatpush2.msra.mxu0 0.0
    %111 = vmatprep.subr.mxu0 0.0
    %112 = vmatpush2.msra.mxu0 0.0
    %113 = vmatprep.subr.mxu0 0.0
    %114 = vmatpush2.msra.mxu0 0.0
    %115 = vmatprep.subr.mxu0 0.0
    %116 = vmatpush2.msra.mxu0 0.0
    %117 = vmatprep.subr.mxu0 0.0
    %118 = vmatpush2.msra.mxu0 0.0
    %119 = vmatprep.subr.mxu0 0.0
    %120 = vmatpush2.msra.mxu0 0.0
    %121 = vmatprep.subr.mxu0 0.0
    %122 = vmatpush2.msra.mxu0 0.0
    %123 = vmatprep.subr.mxu0 0.0
    %124 = vmatpush2.msra.mxu0 0.0
    %125 = vmatprep.subr.mxu0 0.0
    %126 = vmatpush2.msra.mxu0 0.0
    %127 = vmatprep.subr.mxu0 0.0
    %128 = vmatpush2.msra.mxu0 0.0
    %129 = vmatprep.subr.mxu0 0.0
    %130 = vmatpush2.msra.mxu0 0.0
    %131 = vmatprep.subr.mxu0 0.0
    %132 = vmatpush2.msra.mxu0 0.0
    %133 = vmatprep.subr.mxu0 0.0
    %134 = vmatpush2.msra.mxu0 0.0
    %135 = vmatprep.subr.mxu0 0.0
    %136 = vmatpush2.msra.mxu0 0.0
    %137 = vmatprep.subr.mxu0 0.0
    %138 = vmatpush2.msra.mxu0 0.0
    %139 = vmatprep.mubr.f32.mxu0 0.0
    %140 = vmatmul.mubr.f32.gmra.mxu0 %v70
    %v141 = vpop.f32.mrf.mxu0
    %v142 = vadd.f32 %v67, %v141
    %v143 = vpop.f32.mrf.mxu0
    %144 = vmatprep.mubr.f32.mxu0 0.0
    %145 = vmatmul.mubr.f32.gmra.mxu0 %v73
    %v146 = vpop.f32.mrf.mxu0
    %v147 = vadd.f32 %v67, %v146
    %v148 = vpop.f32.mrf.mxu0
    %149 = vdwg.mxu0
    %v150 = vld [vmem:[%s2] sm:$0xff]
    %s151 = sld [smem:[#allocation2]]
    %v152 = vstv %s151
    %v153 = vmul.f32 %v152, %v150
    %v154 = vadd.f32 %v142, %v153
    %v155 = vadd.f32 %v147, %v153
    %v156 = vld [vmem:[%s5] sm:$0xff]
    %v157 = vld [vmem:[%s5 + $0x8] sm:$0xff]
    %v158 = vld [vmem:[%s5 + $0x10] sm:$0xff]
    %v159 = vld [vmem:[%s5 + $0x18] sm:$0xff]
    %vm160 = vcmask 261120
    %v162 = vsel %vm160, %v154, 0
    %v165 = vsel %vm160, %v155, 0
    %167 = vmatprep.subr.mxu0 0.0
    %168 = vmatpush1.msra.mxu0 0.0
    %169 = vmatprep.subr.mxu0 0.0
    %170 = vmatpush1.msra.mxu0 0.0
    %171 = vmatprep.subr.mxu0 0.0
    %172 = vmatpush1.msra.mxu0 0.0
    %173 = vmatprep.subr.mxu0 0.0
    %174 = vmatpush1.msra.mxu0 0.0
    %175 = vmatprep.subr.mxu0 0.0
    %176 = vmatpush1.msra.mxu0 0.0
    %177 = vmatprep.subr.mxu0 0.0
    %178 = vmatpush1.msra.mxu0 0.0
    %179 = vmatprep.subr.mxu0 0.0
    %180 = vmatpush1.msra.mxu0 0.0
    %181 = vmatprep.subr.mxu0 0.0
    %182 = vmatpush1.msra.mxu0 0.0
    %183 = vmatprep.subr.mxu0 0.0
    %184 = vmatpush1.msra.mxu0 0.0
    %185 = vmatprep.subr.mxu0 0.0
    %186 = vmatpush1.msra.mxu0 0.0
    %187 = vmatprep.subr.mxu0 0.0
    %188 = vmatpush1.msra.mxu0 0.0
    %189 = vmatprep.subr.mxu0 0.0
    %190 = vmatpush1.msra.mxu0 0.0
    %191 = vmatprep.subr.mxu0 0.0
    %192 = vmatpush1.msra.mxu0 %v159
    %193 = vmatprep.subr.mxu0 0.0
    %194 = vmatpush1.msra.mxu0 %v158
    %195 = vmatprep.subr.mxu0 0.0
    %196 = vmatpush1.msra.mxu0 %v157
    %197 = vmatprep.subr.mxu0 0.0
    %198 = vmatpush1.msra.mxu0 %v156
    %199 = vmatprep.subr.mxu0 0.0
    %200 = vmatpush2.msra.mxu0 0.0
    %201 = vmatprep.subr.mxu0 0.0
    %202 = vmatpush2.msra.mxu0 0.0
    %203 = vmatprep.subr.mxu0 0.0
    %204 = vmatpush2.msra.mxu0 0.0
    %205 = vmatprep.subr.mxu0 0.0
    %206 = vmatpush2.msra.mxu0 0.0
    %207 = vmatprep.subr.mxu0 0.0
    %208 = vmatpush2.msra.mxu0 0.0
    %209 = vmatprep.subr.mxu0 0.0
    %210 = vmatpush2.msra.mxu0 0.0
    %211 = vmatprep.subr.mxu0 0.0
    %212 = vmatpush2.msra.mxu0 0.0
    %213 = vmatprep.subr.mxu0 0.0
    %214 = vmatpush2.msra.mxu0 0.0
    %215 = vmatprep.subr.mxu0 0.0
    %216 = vmatpush2.msra.mxu0 0.0
    %217 = vmatprep.subr.mxu0 0.0
    %218 = vmatpush2.msra.mxu0 0.0
    %219 = vmatprep.subr.mxu0 0.0
    %220 = vmatpush2.msra.mxu0 0.0
    %221 = vmatprep.subr.mxu0 0.0
    %222 = vmatpush2.msra.mxu0 0.0
    %223 = vmatprep.subr.mxu0 0.0
    %224 = vmatpush2.msra.mxu0 0.0
    %225 = vmatprep.subr.mxu0 0.0
    %226 = vmatpush2.msra.mxu0 0.0
    %227 = vmatprep.subr.mxu0 0.0
    %228 = vmatpush2.msra.mxu0 0.0
    %229 = vmatprep.subr.mxu0 0.0
    %230 = vmatpush2.msra.mxu0 0.0
    %231 = vmatprep.mubr.f32.mxu0 0.0
    %232 = vmatmul.mubr.f32.gmra.mxu0 %v162
    %v233 = vpop.f32.mrf.mxu0
    %v234 = vadd.f32 0.0, %v233
    %v235 = vpop.f32.mrf.mxu0
    %236 = vmatprep.mubr.f32.mxu0 0.0
    %237 = vmatmul.mubr.f32.gmra.mxu0 %v165
    %v238 = vpop.f32.mrf.mxu0
    %v239 = vadd.f32 0.0, %v238
    %v240 = vpop.f32.mrf.mxu0
    %241 = vdwg.mxu0
    %v242 = vld [vmem:[%s11 + $0x3] sm:$0x1]
    %v243 = vlaneseq
    %v244 = vshrl.u32 %v243, 7
    %v245 = vsub.s32 0, %v244
    %v246 = vrot.slane %v242, %v245
    %248 = vrot.lane.b32.xlu0 %v246, 64
    %v249 = vpop.permute.xlu0 %248
    %v251 = vadd.f32 %v234, %v249
    %v252 = vadd.f32 %v239, %v249
    %v253 = vld [vmem:[%s6] sm:$0xff]
    %v254 = vld [vmem:[%s6 + $0x8] sm:$0xff]
    %v255 = vld [vmem:[%s6 + $0x10] sm:$0xff]
    %v256 = vld [vmem:[%s6 + $0x18] sm:$0xff]
    %v257 = vld [vmem:[%s11 + $0x4] sm:$0x1]
    %v258 = vlaneseq
    %v259 = vshrl.u32 %v258, 7
    %v260 = vsub.s32 0, %v259
    %v261 = vrot.slane %v257, %v260
    %264 = vrot.lane.b32.xlu0 %v251, 64
    %v265 = vpop.permute.xlu0 %264
    %266 = vrot.lane.b32.xlu0 %v252, 64
    %v267 = vpop.permute.xlu0 %266
    %v268 = vsel %vm160, %v265, 0
    %v270 = vsel %vm160, %v267, 0
    %272 = vmatprep.subr.mxu0 0.0
    %273 = vmatpush1.msra.mxu0 0.0
    %274 = vmatprep.subr.mxu0 0.0
    %275 = vmatpush1.msra.mxu0 0.0
    %276 = vmatprep.subr.mxu0 0.0
    %277 = vmatpush1.msra.mxu0 0.0
    %278 = vmatprep.subr.mxu0 0.0
    %279 = vmatpush1.msra.mxu0 0.0
    %280 = vmatprep.subr.mxu0 0.0
    %281 = vmatpush1.msra.mxu0 0.0
    %282 = vmatprep.subr.mxu0 0.0
    %283 = vmatpush1.msra.mxu0 0.0
    %284 = vmatprep.subr.mxu0 0.0
    %285 = vmatpush1.msra.mxu0 0.0
    %286 = vmatprep.subr.mxu0 0.0
    %287 = vmatpush1.msra.mxu0 0.0
    %288 = vmatprep.subr.mxu0 0.0
    %289 = vmatpush1.msra.mxu0 0.0
    %290 = vmatprep.subr.mxu0 0.0
    %291 = vmatpush1.msra.mxu0 0.0
    %292 = vmatprep.subr.mxu0 0.0
    %293 = vmatpush1.msra.mxu0 0.0
    %294 = vmatprep.subr.mxu0 0.0
    %295 = vmatpush1.msra.mxu0 0.0
    %296 = vmatprep.subr.mxu0 0.0
    %297 = vmatpush1.msra.mxu0 %v256
    %298 = vmatprep.subr.mxu0 0.0
    %299 = vmatpush1.msra.mxu0 %v255
    %300 = vmatprep.subr.mxu0 0.0
    %301 = vmatpush1.msra.mxu0 %v254
    %302 = vmatprep.subr.mxu0 0.0
    %303 = vmatpush1.msra.mxu0 %v253
    %304 = vmatprep.subr.mxu0 0.0
    %305 = vmatpush2.msra.mxu0 0.0
    %306 = vmatprep.subr.mxu0 0.0
    %307 = vmatpush2.msra.mxu0 0.0
    %308 = vmatprep.subr.mxu0 0.0
    %309 = vmatpush2.msra.mxu0 0.0
    %310 = vmatprep.subr.mxu0 0.0
    %311 = vmatpush2.msra.mxu0 0.0
    %312 = vmatprep.subr.mxu0 0.0
    %313 = vmatpush2.msra.mxu0 0.0
    %314 = vmatprep.subr.mxu0 0.0
    %315 = vmatpush2.msra.mxu0 0.0
    %316 = vmatprep.subr.mxu0 0.0
    %317 = vmatpush2.msra.mxu0 0.0
    %318 = vmatprep.subr.mxu0 0.0
    %319 = vmatpush2.msra.mxu0 0.0
    %320 = vmatprep.subr.mxu0 0.0
    %321 = vmatpush2.msra.mxu0 0.0
    %322 = vmatprep.subr.mxu0 0.0
    %323 = vmatpush2.msra.mxu0 0.0
    %324 = vmatprep.subr.mxu0 0.0
    %325 = vmatpush2.msra.mxu0 0.0
    %326 = vmatprep.subr.mxu0 0.0
    %327 = vmatpush2.msra.mxu0 0.0
    %328 = vmatprep.subr.mxu0 0.0
    %329 = vmatpush2.msra.mxu0 0.0
    %330 = vmatprep.subr.mxu0 0.0
    %331 = vmatpush2.msra.mxu0 0.0
    %332 = vmatprep.subr.mxu0 0.0
    %333 = vmatpush2.msra.mxu0 0.0
    %334 = vmatprep.subr.mxu0 0.0
    %335 = vmatpush2.msra.mxu0 0.0
    %336 = vmatprep.mubr.f32.mxu0 0.0
    %337 = vmatmul.mubr.f32.gmra.mxu0 %v268
    %v338 = vpop.f32.mrf.mxu0
    %v339 = vadd.f32 %v261, %v338
    %v340 = vpop.f32.mrf.mxu0
    %341 = vmatprep.mubr.f32.mxu0 0.0
    %342 = vmatmul.mubr.f32.gmra.mxu0 %v270
    %v343 = vpop.f32.mrf.mxu0
    %v344 = vadd.f32 %v261, %v343
    %v345 = vpop.f32.mrf.mxu0
    %346 = vdwg.mxu0
    %v347 = vadd.f32 %v154, %v339
    %v348 = vadd.f32 %v155, %v344
    %v349 = vld [vmem:[%s11 + $0x5] sm:$0x1]
    %v350 = vld [vmem:[%s11 + $0x6] sm:$0x1]
    %v351 = vsel %vm160, %v347, 0.0
    %352 = vadd.xlane.f32.xlu0 %v351
    %v353 = vpop.xlane.xlu0 %352
    %v354 = vsel %vm160, %v348, 0.0
    %355 = vadd.xlane.f32.xlu0 %v354
    %v356 = vpop.xlane.xlu0 %355
    %v357 = vrcp.pop 32.0
    %v358 = vmul.f32 %v353, %v357
    %v359 = vmul.f32 %v356, %v357
    %v360 = vsub.f32 %v347, %v358
    %v361 = vsub.f32 %v348, %v359
    %v362 = vmul.f32 %v360, %v360
    %v363 = vmul.f32 %v361, %v361
    %v364 = vsel %vm160, %v362, 0.0
    %365 = vadd.xlane.f32.xlu0 %v364
    %v366 = vpop.xlane.xlu0 %365
    %v367 = vsel %vm160, %v363, 0.0
    %368 = vadd.xlane.f32.xlu0 %v367
    %v369 = vpop.xlane.xlu0 %368
    %v370 = vmul.f32 %v366, %v357
    %v371 = vmul.f32 %v369, %v357
    %v372 = vadd.f32 %v370, 1e-05
    %v373 = vadd.f32 %v371, 1e-05
    %v374 = vrsqrt.pop %v372
    %v375 = vrsqrt.pop %v373
    %v376 = vmul.f32 %v360, %v374
    %v377 = vmul.f32 %v361, %v375
    %v378 = vlaneseq
    %v379 = vshrl.u32 %v378, 7
    %v380 = vsub.s32 0, %v379
    %v381 = vrot.slane %v349, %v380
    %v382 = vmul.f32 %v376, %v381
    %v383 = vmul.f32 %v377, %v381
    %v384 = vlaneseq
    %v385 = vshrl.u32 %v384, 7
    %v386 = vsub.s32 0, %v385
    %v387 = vrot.slane %v350, %v386
    %v388 = vadd.f32 %v382, %v387
    %v389 = vadd.f32 %v383, %v387
    %v390 = vld [vmem:[%s7] sm:$0xff]
    %v391 = vld [vmem:[%s7 + $0x8] sm:$0xff]
    %v392 = vld [vmem:[%s7 + $0x10] sm:$0xff]
    %v393 = vld [vmem:[%s7 + $0x18] sm:$0xff]
    %v394 = vld [vmem:[%s11 + $0x7] sm:$0x1]
    %v395 = vlaneseq
    %v396 = vshrl.u32 %v395, 7
    %v397 = vsub.s32 0, %v396
    %v398 = vrot.slane %v394, %v397
    %v400 = vsel %vm160, %v388, 0
    %v403 = vsel %vm160, %v389, 0
    %405 = vmatprep.subr.mxu0 0.0
    %406 = vmatpush1.msra.mxu0 0.0
    %407 = vmatprep.subr.mxu0 0.0
    %408 = vmatpush1.msra.mxu0 0.0
    %409 = vmatprep.subr.mxu0 0.0
    %410 = vmatpush1.msra.mxu0 0.0
    %411 = vmatprep.subr.mxu0 0.0
    %412 = vmatpush1.msra.mxu0 0.0
    %413 = vmatprep.subr.mxu0 0.0
    %414 = vmatpush1.msra.mxu0 0.0
    %415 = vmatprep.subr.mxu0 0.0
    %416 = vmatpush1.msra.mxu0 0.0
    %417 = vmatprep.subr.mxu0 0.0
    %418 = vmatpush1.msra.mxu0 0.0
    %419 = vmatprep.subr.mxu0 0.0
    %420 = vmatpush1.msra.mxu0 0.0
    %421 = vmatprep.subr.mxu0 0.0
    %422 = vmatpush1.msra.mxu0 0.0
    %423 = vmatprep.subr.mxu0 0.0
    %424 = vmatpush1.msra.mxu0 0.0
    %425 = vmatprep.subr.mxu0 0.0
    %426 = vmatpush1.msra.mxu0 0.0
    %427 = vmatprep.subr.mxu0 0.0
    %428 = vmatpush1.msra.mxu0 0.0
    %429 = vmatprep.subr.mxu0 0.0
    %430 = vmatpush1.msra.mxu0 %v393
    %431 = vmatprep.subr.mxu0 0.0
    %432 = vmatpush1.msra.mxu0 %v392
    %433 = vmatprep.subr.mxu0 0.0
    %434 = vmatpush1.msra.mxu0 %v391
    %435 = vmatprep.subr.mxu0 0.0
    %436 = vmatpush1.msra.mxu0 %v390
    %437 = vmatprep.subr.mxu0 0.0
    %438 = vmatpush2.msra.mxu0 0.0
    %439 = vmatprep.subr.mxu0 0.0
    %440 = vmatpush2.msra.mxu0 0.0
    %441 = vmatprep.subr.mxu0 0.0
    %442 = vmatpush2.msra.mxu0 0.0
    %443 = vmatprep.subr.mxu0 0.0
    %444 = vmatpush2.msra.mxu0 0.0
    %445 = vmatprep.subr.mxu0 0.0
    %446 = vmatpush2.msra.mxu0 0.0
    %447 = vmatprep.subr.mxu0 0.0
    %448 = vmatpush2.msra.mxu0 0.0
    %449 = vmatprep.subr.mxu0 0.0
    %450 = vmatpush2.msra.mxu0 0.0
    %451 = vmatprep.subr.mxu0 0.0
    %452 = vmatpush2.msra.mxu0 0.0
    %453 = vmatprep.subr.mxu0 0.0
    %454 = vmatpush2.msra.mxu0 0.0
    %455 = vmatprep.subr.mxu0 0.0
    %456 = vmatpush2.msra.mxu0 0.0
    %457 = vmatprep.subr.mxu0 0.0
    %458 = vmatpush2.msra.mxu0 0.0
    %459 = vmatprep.subr.mxu0 0.0
    %460 = vmatpush2.msra.mxu0 0.0
    %461 = vmatprep.subr.mxu0 0.0
    %462 = vmatpush2.msra.mxu0 0.0
    %463 = vmatprep.subr.mxu0 0.0
    %464 = vmatpush2.msra.mxu0 0.0
    %465 = vmatprep.subr.mxu0 0.0
    %466 = vmatpush2.msra.mxu0 0.0
    %467 = vmatprep.subr.mxu0 0.0
    %468 = vmatpush2.msra.mxu0 0.0
    %469 = vmatprep.mubr.f32.mxu0 0.0
    %470 = vmatmul.mubr.f32.gmra.mxu0 %v400
    %v471 = vpop.f32.mrf.mxu0
    %v472 = vadd.f32 %v398, %v471
    %v473 = vpop.f32.mrf.mxu0
    %474 = vmatprep.mubr.f32.mxu0 0.0
    %475 = vmatmul.mubr.f32.gmra.mxu0 %v403
    %v476 = vpop.f32.mrf.mxu0
    %v477 = vadd.f32 %v398, %v476
    %v478 = vpop.f32.mrf.mxu0
    %479 = vdwg.mxu0
    %v480 = vmax.f32 %v472, 0.0
    %v481 = vmax.f32 %v477, 0.0
    %v482 = vld [vmem:[%s8] sm:$0xff]
    %v483 = vld [vmem:[%s8 + $0x8] sm:$0xff]
    %v484 = vld [vmem:[%s8 + $0x10] sm:$0xff]
    %v485 = vld [vmem:[%s8 + $0x18] sm:$0xff]
    %v486 = vld [vmem:[%s11 + $0x8] sm:$0x1]
    %v487 = vlaneseq
    %v488 = vshrl.u32 %v487, 7
    %v489 = vsub.s32 0, %v488
    %v490 = vrot.slane %v486, %v489
    %v492 = vsel %vm160, %v480, 0
    %v495 = vsel %vm160, %v481, 0
    %497 = vmatprep.subr.mxu0 0.0
    %498 = vmatpush1.msra.mxu0 0.0
    %499 = vmatprep.subr.mxu0 0.0
    %500 = vmatpush1.msra.mxu0 0.0
    %501 = vmatprep.subr.mxu0 0.0
    %502 = vmatpush1.msra.mxu0 0.0
    %503 = vmatprep.subr.mxu0 0.0
    %504 = vmatpush1.msra.mxu0 0.0
    %505 = vmatprep.subr.mxu0 0.0
    %506 = vmatpush1.msra.mxu0 0.0
    %507 = vmatprep.subr.mxu0 0.0
    %508 = vmatpush1.msra.mxu0 0.0
    %509 = vmatprep.subr.mxu0 0.0
    %510 = vmatpush1.msra.mxu0 0.0
    %511 = vmatprep.subr.mxu0 0.0
    %512 = vmatpush1.msra.mxu0 0.0
    %513 = vmatprep.subr.mxu0 0.0
    %514 = vmatpush1.msra.mxu0 0.0
    %515 = vmatprep.subr.mxu0 0.0
    %516 = vmatpush1.msra.mxu0 0.0
    %517 = vmatprep.subr.mxu0 0.0
    %518 = vmatpush1.msra.mxu0 0.0
    %519 = vmatprep.subr.mxu0 0.0
    %520 = vmatpush1.msra.mxu0 0.0
    %521 = vmatprep.subr.mxu0 0.0
    %522 = vmatpush1.msra.mxu0 %v485
    %523 = vmatprep.subr.mxu0 0.0
    %524 = vmatpush1.msra.mxu0 %v484
    %525 = vmatprep.subr.mxu0 0.0
    %526 = vmatpush1.msra.mxu0 %v483
    %527 = vmatprep.subr.mxu0 0.0
    %528 = vmatpush1.msra.mxu0 %v482
    %529 = vmatprep.subr.mxu0 0.0
    %530 = vmatpush2.msra.mxu0 0.0
    %531 = vmatprep.subr.mxu0 0.0
    %532 = vmatpush2.msra.mxu0 0.0
    %533 = vmatprep.subr.mxu0 0.0
    %534 = vmatpush2.msra.mxu0 0.0
    %535 = vmatprep.subr.mxu0 0.0
    %536 = vmatpush2.msra.mxu0 0.0
    %537 = vmatprep.subr.mxu0 0.0
    %538 = vmatpush2.msra.mxu0 0.0
    %539 = vmatprep.subr.mxu0 0.0
    %540 = vmatpush2.msra.mxu0 0.0
    %541 = vmatprep.subr.mxu0 0.0
    %542 = vmatpush2.msra.mxu0 0.0
    %543 = vmatprep.subr.mxu0 0.0
    %544 = vmatpush2.msra.mxu0 0.0
    %545 = vmatprep.subr.mxu0 0.0
    %546 = vmatpush2.msra.mxu0 0.0
    %547 = vmatprep.subr.mxu0 0.0
    %548 = vmatpush2.msra.mxu0 0.0
    %549 = vmatprep.subr.mxu0 0.0
    %550 = vmatpush2.msra.mxu0 0.0
    %551 = vmatprep.subr.mxu0 0.0
    %552 = vmatpush2.msra.mxu0 0.0
    %553 = vmatprep.subr.mxu0 0.0
    %554 = vmatpush2.msra.mxu0 0.0
    %555 = vmatprep.subr.mxu0 0.0
    %556 = vmatpush2.msra.mxu0 0.0
    %557 = vmatprep.subr.mxu0 0.0
    %558 = vmatpush2.msra.mxu0 0.0
    %559 = vmatprep.subr.mxu0 0.0
    %560 = vmatpush2.msra.mxu0 0.0
    %561 = vmatprep.mubr.f32.mxu0 0.0
    %562 = vmatmul.mubr.f32.gmra.mxu0 %v492
    %v563 = vpop.f32.mrf.mxu0
    %v564 = vadd.f32 %v490, %v563
    %v565 = vpop.f32.mrf.mxu0
    %566 = vmatprep.mubr.f32.mxu0 0.0
    %567 = vmatmul.mubr.f32.gmra.mxu0 %v495
    %v568 = vpop.f32.mrf.mxu0
    %v569 = vadd.f32 %v490, %v568
    %v570 = vpop.f32.mrf.mxu0
    %571 = vdwg.mxu0
    %v572 = vadd.f32 %v388, %v564
    %v573 = vadd.f32 %v389, %v569
    %v574 = vld [vmem:[%s11 + $0x9] sm:$0x1]
    %v575 = vld [vmem:[%s11 + $0xa] sm:$0x1]
    %v576 = vsel %vm160, %v572, 0.0
    %577 = vadd.xlane.f32.xlu0 %v576
    %v578 = vpop.xlane.xlu0 %577
    %v579 = vsel %vm160, %v573, 0.0
    %580 = vadd.xlane.f32.xlu0 %v579
    %v581 = vpop.xlane.xlu0 %580
    %v582 = vmul.f32 %v578, %v357
    %v583 = vmul.f32 %v581, %v357
    %v584 = vsub.f32 %v572, %v582
    %v585 = vsub.f32 %v573, %v583
    %v586 = vmul.f32 %v584, %v584
    %v587 = vmul.f32 %v585, %v585
    %v588 = vsel %vm160, %v586, 0.0
    %589 = vadd.xlane.f32.xlu0 %v588
    %v590 = vpop.xlane.xlu0 %589
    %v591 = vsel %vm160, %v587, 0.0
    %592 = vadd.xlane.f32.xlu0 %v591
    %v593 = vpop.xlane.xlu0 %592
    %v594 = vmul.f32 %v590, %v357
    %v595 = vmul.f32 %v593, %v357
    %v596 = vadd.f32 %v594, 1e-05
    %v597 = vadd.f32 %v595, 1e-05
    %v598 = vrsqrt.pop %v596
    %v599 = vrsqrt.pop %v597
    %v600 = vmul.f32 %v584, %v598
    %v601 = vmul.f32 %v585, %v599
    %v602 = vlaneseq
    %v603 = vshrl.u32 %v602, 7
    %v604 = vsub.s32 0, %v603
    %v605 = vrot.slane %v574, %v604
    %v606 = vmul.f32 %v600, %v605
    %v607 = vmul.f32 %v601, %v605
    %v608 = vlaneseq
    %v609 = vshrl.u32 %v608, 7
    %v610 = vsub.s32 0, %v609
    %v611 = vrot.slane %v575, %v610
    %v612 = vadd.f32 %v606, %v611
    %v613 = vadd.f32 %v607, %v611
    %v614 = vld [vmem:[%s11 + $0xb] sm:$0x1]
    %v615 = vld [vmem:[%s11 + $0xc] sm:$0x1]
    %v616 = vsel %vm160, %v612, 0.0
    %617 = vadd.xlane.f32.xlu0 %v616
    %v618 = vpop.xlane.xlu0 %617
    %v619 = vsel %vm160, %v613, 0.0
    %620 = vadd.xlane.f32.xlu0 %v619
    %v621 = vpop.xlane.xlu0 %620
    %v622 = vmul.f32 %v618, %v357
    %v623 = vmul.f32 %v621, %v357
    %v624 = vsub.f32 %v612, %v622
    %v625 = vsub.f32 %v613, %v623
    %v626 = vmul.f32 %v624, %v624
    %v627 = vmul.f32 %v625, %v625
    %v628 = vsel %vm160, %v626, 0.0
    %629 = vadd.xlane.f32.xlu0 %v628
    %v630 = vpop.xlane.xlu0 %629
    %v631 = vsel %vm160, %v627, 0.0
    %632 = vadd.xlane.f32.xlu0 %v631
    %v633 = vpop.xlane.xlu0 %632
    %v634 = vmul.f32 %v630, %v357
    %v635 = vmul.f32 %v633, %v357
    %v636 = vadd.f32 %v634, 1e-05
    %v637 = vadd.f32 %v635, 1e-05
    %v638 = vrsqrt.pop %v636
    %v639 = vrsqrt.pop %v637
    %v640 = vmul.f32 %v624, %v638
    %v641 = vmul.f32 %v625, %v639
    %v642 = vlaneseq
    %v643 = vshrl.u32 %v642, 7
    %v644 = vsub.s32 0, %v643
    %v645 = vrot.slane %v614, %v644
    %v646 = vmul.f32 %v640, %v645
    %v647 = vmul.f32 %v641, %v645
    %v648 = vlaneseq
    %v649 = vshrl.u32 %v648, 7
    %v650 = vsub.s32 0, %v649
    %v651 = vrot.slane %v615, %v650
    %v652 = vadd.f32 %v646, %v651
    %v653 = vadd.f32 %v647, %v651
    %v654 = vld [vmem:[%s9] sm:$0xff]
    %v655 = vld [vmem:[%s9 + $0x8] sm:$0xff]
    %v656 = vld [vmem:[%s9 + $0x10] sm:$0xff]
    %v657 = vld [vmem:[%s9 + $0x18] sm:$0xff]
    %v658 = vld [vmem:[%s11 + $0xd] sm:$0x1]
    %v659 = vlaneseq
    %v660 = vshrl.u32 %v659, 7
    %v661 = vsub.s32 0, %v660
    %v662 = vrot.slane %v658, %v661
    %v664 = vsel %vm160, %v652, 0
    %v667 = vsel %vm160, %v653, 0
    %669 = vmatprep.subr.mxu0 0.0
    %670 = vmatpush1.msra.mxu0 0.0
    %671 = vmatprep.subr.mxu0 0.0
    %672 = vmatpush1.msra.mxu0 0.0
    %673 = vmatprep.subr.mxu0 0.0
    %674 = vmatpush1.msra.mxu0 0.0
    %675 = vmatprep.subr.mxu0 0.0
    %676 = vmatpush1.msra.mxu0 0.0
    %677 = vmatprep.subr.mxu0 0.0
    %678 = vmatpush1.msra.mxu0 0.0
    %679 = vmatprep.subr.mxu0 0.0
    %680 = vmatpush1.msra.mxu0 0.0
    %681 = vmatprep.subr.mxu0 0.0
    %682 = vmatpush1.msra.mxu0 0.0
    %683 = vmatprep.subr.mxu0 0.0
    %684 = vmatpush1.msra.mxu0 0.0
    %685 = vmatprep.subr.mxu0 0.0
    %686 = vmatpush1.msra.mxu0 0.0
    %687 = vmatprep.subr.mxu0 0.0
    %688 = vmatpush1.msra.mxu0 0.0
    %689 = vmatprep.subr.mxu0 0.0
    %690 = vmatpush1.msra.mxu0 0.0
    %691 = vmatprep.subr.mxu0 0.0
    %692 = vmatpush1.msra.mxu0 0.0
    %693 = vmatprep.subr.mxu0 0.0
    %694 = vmatpush1.msra.mxu0 %v657
    %695 = vmatprep.subr.mxu0 0.0
    %696 = vmatpush1.msra.mxu0 %v656
    %697 = vmatprep.subr.mxu0 0.0
    %698 = vmatpush1.msra.mxu0 %v655
    %699 = vmatprep.subr.mxu0 0.0
    %700 = vmatpush1.msra.mxu0 %v654
    %701 = vmatprep.subr.mxu0 0.0
    %702 = vmatpush2.msra.mxu0 0.0
    %703 = vmatprep.subr.mxu0 0.0
    %704 = vmatpush2.msra.mxu0 0.0
    %705 = vmatprep.subr.mxu0 0.0
    %706 = vmatpush2.msra.mxu0 0.0
    %707 = vmatprep.subr.mxu0 0.0
    %708 = vmatpush2.msra.mxu0 0.0
    %709 = vmatprep.subr.mxu0 0.0
    %710 = vmatpush2.msra.mxu0 0.0
    %711 = vmatprep.subr.mxu0 0.0
    %712 = vmatpush2.msra.mxu0 0.0
    %713 = vmatprep.subr.mxu0 0.0
    %714 = vmatpush2.msra.mxu0 0.0
    %715 = vmatprep.subr.mxu0 0.0
    %716 = vmatpush2.msra.mxu0 0.0
    %717 = vmatprep.subr.mxu0 0.0
    %718 = vmatpush2.msra.mxu0 0.0
    %719 = vmatprep.subr.mxu0 0.0
    %720 = vmatpush2.msra.mxu0 0.0
    %721 = vmatprep.subr.mxu0 0.0
    %722 = vmatpush2.msra.mxu0 0.0
    %723 = vmatprep.subr.mxu0 0.0
    %724 = vmatpush2.msra.mxu0 0.0
    %725 = vmatprep.subr.mxu0 0.0
    %726 = vmatpush2.msra.mxu0 0.0
    %727 = vmatprep.subr.mxu0 0.0
    %728 = vmatpush2.msra.mxu0 0.0
    %729 = vmatprep.subr.mxu0 0.0
    %730 = vmatpush2.msra.mxu0 0.0
    %731 = vmatprep.subr.mxu0 0.0
    %732 = vmatpush2.msra.mxu0 0.0
    %733 = vmatprep.mubr.f32.mxu0 0.0
    %734 = vmatmul.mubr.f32.gmra.mxu0 %v664
    %v735 = vpop.f32.mrf.mxu0
    %v736 = vadd.f32 %v662, %v735
    %v737 = vpop.f32.mrf.mxu0
    %738 = vmatprep.mubr.f32.mxu0 0.0
    %739 = vmatmul.mubr.f32.gmra.mxu0 %v667
    %v740 = vpop.f32.mrf.mxu0
    %v741 = vadd.f32 %v662, %v740
    %v742 = vpop.f32.mrf.mxu0
    %743 = vdwg.mxu0
    %746 = vrot.lane.b32.xlu0 %v736, 119
    %v747 = vpop.permute.xlu0 %746
    %748 = vrot.lane.b32.xlu0 %v741, 119
    %v749 = vpop.permute.xlu0 %748
    %vm752 = vcmask 48128
    %753 = vst.msk [vmem:[%s12] sm:$0xff] %vm752, %v747
    %754 = vst.msk [vmem:[%s12 + $0x8] sm:$0xff] %vm752, %v749
    %vm755 = vcmask 72704
    %v756 = vsel %vm755, %v736, -inf
    %757 = vmax.xlane.f32.xlu0 %v756
    %v758 = vpop.xlane.xlu0 %757
    %v759 = vsel %vm755, %v741, -inf
    %760 = vmax.xlane.f32.xlu0 %v759
    %v761 = vpop.xlane.xlu0 %760
    %v762 = vsub.f32 %v736, %v758
    %v763 = vsub.f32 %v741, %v761
    %v764 = vmul.f32 %v762, 1.442695
    %v765 = vpow.pop %v764
    %v766 = vmul.f32 %v763, 1.442695
    %v767 = vpow.pop %v766
    %v768 = vsel %vm755, %v765, 0.0
    %769 = vadd.xlane.f32.xlu0 %v768
    %v770 = vpop.xlane.xlu0 %769
    %v771 = vsel %vm755, %v767, 0.0
    %772 = vadd.xlane.f32.xlu0 %v771
    %v773 = vpop.xlane.xlu0 %772
    %v774 = vrcp.pop %v770
    %v775 = vmul.f32 %v765, %v774
    %v776 = vrcp.pop %v773
    %v777 = vmul.f32 %v767, %v776
    %v778 = vld [vmem:[%s1] sm:$0xff]
    %v779 = vld [vmem:[%s1 + $0x8] sm:$0x1]
    %v780 = vld [vmem:[%s1 + $0x10] sm:$0xff]
    %v781 = vld [vmem:[%s1 + $0x18] sm:$0x1]
    %v782 = vld [vmem:[%s1 + $0x20] sm:$0xff]
    %v783 = vld [vmem:[%s1 + $0x28] sm:$0x1]
    %v784 = vld [vmem:[%s1 + $0x30] sm:$0xff]
    %v785 = vld [vmem:[%s1 + $0x38] sm:$0x1]
    %v786 = vld [vmem:[%s1 + $0x40] sm:$0xff]
    %v787 = vld [vmem:[%s1 + $0x48] sm:$0x1]
    %v788 = vld [vmem:[%s1 + $0x50] sm:$0xff]
    %v789 = vld [vmem:[%s1 + $0x58] sm:$0x1]
    %v790 = vld [vmem:[%s1 + $0x60] sm:$0xff]
    %v791 = vld [vmem:[%s1 + $0x68] sm:$0x1]
    %v792 = vld [vmem:[%s1 + $0x70] sm:$0xff]
    %v793 = vld [vmem:[%s1 + $0x78] sm:$0x1]
    %v794 = vld [vmem:[%s1 + $0x80] sm:$0xff]
    %v795 = vld [vmem:[%s1 + $0x88] sm:$0x1]
    %v796 = vld [vmem:[%s1 + $0x90] sm:$0xff]
    %v797 = vld [vmem:[%s1 + $0x98] sm:$0x1]
    %v798 = vld [vmem:[%s1 + $0xa0] sm:$0xff]
    %v799 = vld [vmem:[%s1 + $0xa8] sm:$0x1]
    %v800 = vld [vmem:[%s1 + $0xb0] sm:$0xff]
    %v801 = vld [vmem:[%s1 + $0xb8] sm:$0x1]
    %v802 = vld [vmem:[%s1 + $0xc0] sm:$0xff]
    %v803 = vld [vmem:[%s1 + $0xc8] sm:$0x1]
    %v804 = vld [vmem:[%s1 + $0xd0] sm:$0xff]
    %v805 = vld [vmem:[%s1 + $0xd8] sm:$0x1]
    %v806 = vld [vmem:[%s1 + $0xe0] sm:$0xff]
    %v807 = vld [vmem:[%s1 + $0xe8] sm:$0x1]
    %v808 = vld [vmem:[%s1 + $0xf0] sm:$0xff]
    %v809 = vld [vmem:[%s1 + $0xf8] sm:$0x1]
    %vm810 = vcmask 523264
    %v811 = vsel %vm810, %v778, 0.0
    %812 = vadd.xlane.f32.xlu0 %v811
    %v813 = vpop.xlane.xlu0 %812
    %vm814 = vcmask 516096
    %v815 = vsel %vm814, %v779, 0.0
    %816 = vadd.xlane.f32.xlu0 %v815
    %v817 = vpop.xlane.xlu0 %816
    %v818 = vsel %vm810, %v780, 0.0
    %819 = vadd.xlane.f32.xlu0 %v818
    %v820 = vpop.xlane.xlu0 %819
    %v821 = vsel %vm814, %v781, 0.0
    %822 = vadd.xlane.f32.xlu0 %v821
    %v823 = vpop.xlane.xlu0 %822
    %v824 = vsel %vm810, %v782, 0.0
    %825 = vadd.xlane.f32.xlu0 %v824
    %v826 = vpop.xlane.xlu0 %825
    %v827 = vsel %vm814, %v783, 0.0
    %828 = vadd.xlane.f32.xlu0 %v827
    %v829 = vpop.xlane.xlu0 %828
    %v830 = vsel %vm810, %v784, 0.0
    %831 = vadd.xlane.f32.xlu0 %v830
    %v832 = vpop.xlane.xlu0 %831
    %v833 = vsel %vm814, %v785, 0.0
    %834 = vadd.xlane.f32.xlu0 %v833
    %v835 = vpop.xlane.xlu0 %834
    %v836 = vsel %vm810, %v786, 0.0
    %837 = vadd.xlane.f32.xlu0 %v836
    %v838 = vpop.xlane.xlu0 %837
    %v839 = vsel %vm814, %v787, 0.0
    %840 = vadd.xlane.f32.xlu0 %v839
    %v841 = vpop.xlane.xlu0 %840
    %v842 = vsel %vm810, %v788, 0.0
    %843 = vadd.xlane.f32.xlu0 %v842
    %v844 = vpop.xlane.xlu0 %843
    %v845 = vsel %vm814, %v789, 0.0
    %846 = vadd.xlane.f32.xlu0 %v845
    %v847 = vpop.xlane.xlu0 %846
    %v848 = vsel %vm810, %v790, 0.0
    %849 = vadd.xlane.f32.xlu0 %v848
    %v850 = vpop.xlane.xlu0 %849
    %v851 = vsel %vm814, %v791, 0.0
    %852 = vadd.xlane.f32.xlu0 %v851
    %v853 = vpop.xlane.xlu0 %852
    %v854 = vsel %vm810, %v792, 0.0
    %855 = vadd.xlane.f32.xlu0 %v854
    %v856 = vpop.xlane.xlu0 %855
    %v857 = vsel %vm814, %v793, 0.0
    %858 = vadd.xlane.f32.xlu0 %v857
    %v859 = vpop.xlane.xlu0 %858
    %v860 = vsel %vm810, %v794, 0.0
    %861 = vadd.xlane.f32.xlu0 %v860
    %v862 = vpop.xlane.xlu0 %861
    %v863 = vsel %vm814, %v795, 0.0
    %864 = vadd.xlane.f32.xlu0 %v863
    %v865 = vpop.xlane.xlu0 %864
    %v866 = vsel %vm810, %v796, 0.0
    %867 = vadd.xlane.f32.xlu0 %v866
    %v868 = vpop.xlane.xlu0 %867
    %v869 = vsel %vm814, %v797, 0.0
    %870 = vadd.xlane.f32.xlu0 %v869
    %v871 = vpop.xlane.xlu0 %870
    %v872 = vsel %vm810, %v798, 0.0
    %873 = vadd.xlane.f32.xlu0 %v872
    %v874 = vpop.xlane.xlu0 %873
    %v875 = vsel %vm814, %v799, 0.0
    %876 = vadd.xlane.f32.xlu0 %v875
    %v877 = vpop.xlane.xlu0 %876
    %v878 = vsel %vm810, %v800, 0.0
    %879 = vadd.xlane.f32.xlu0 %v878
    %v880 = vpop.xlane.xlu0 %879
    %v881 = vsel %vm814, %v801, 0.0
    %882 = vadd.xlane.f32.xlu0 %v881
    %v883 = vpop.xlane.xlu0 %882
    %v884 = vsel %vm810, %v802, 0.0
    %885 = vadd.xlane.f32.xlu0 %v884
    %v886 = vpop.xlane.xlu0 %885
    %v887 = vsel %vm814, %v803, 0.0
    %888 = vadd.xlane.f32.xlu0 %v887
    %v889 = vpop.xlane.xlu0 %888
    %v890 = vsel %vm810, %v804, 0.0
    %891 = vadd.xlane.f32.xlu0 %v890
    %v892 = vpop.xlane.xlu0 %891
    %v893 = vsel %vm814, %v805, 0.0
    %894 = vadd.xlane.f32.xlu0 %v893
    %v895 = vpop.xlane.xlu0 %894
    %v896 = vsel %vm810, %v806, 0.0
    %897 = vadd.xlane.f32.xlu0 %v896
    %v898 = vpop.xlane.xlu0 %897
    %v899 = vsel %vm814, %v807, 0.0
    %900 = vadd.xlane.f32.xlu0 %v899
    %v901 = vpop.xlane.xlu0 %900
    %v902 = vsel %vm810, %v808, 0.0
    %903 = vadd.xlane.f32.xlu0 %v902
    %v904 = vpop.xlane.xlu0 %903
    %v905 = vsel %vm814, %v809, 0.0
    %906 = vadd.xlane.f32.xlu0 %v905
    %v907 = vpop.xlane.xlu0 %906
    %v908 = vrcp.pop 64.0
    %v909 = vmul.f32 %v813, %v908
    %v910 = vmul.f32 %v817, %v908
    %v911 = vmul.f32 %v820, %v908
    %v912 = vmul.f32 %v823, %v908
    %v913 = vmul.f32 %v826, %v908
    %v914 = vmul.f32 %v829, %v908
    %v915 = vmul.f32 %v832, %v908
    %v916 = vmul.f32 %v835, %v908
    %v917 = vmul.f32 %v838, %v908
    %v918 = vmul.f32 %v841, %v908
    %v919 = vmul.f32 %v844, %v908
    %v920 = vmul.f32 %v847, %v908
    %v921 = vmul.f32 %v850, %v908
    %v922 = vmul.f32 %v853, %v908
    %v923 = vmul.f32 %v856, %v908
    %v924 = vmul.f32 %v859, %v908
    %v925 = vmul.f32 %v862, %v908
    %v926 = vmul.f32 %v865, %v908
    %v927 = vmul.f32 %v868, %v908
    %v928 = vmul.f32 %v871, %v908
    %v929 = vmul.f32 %v874, %v908
    %v930 = vmul.f32 %v877, %v908
    %v931 = vmul.f32 %v880, %v908
    %v932 = vmul.f32 %v883, %v908
    %v933 = vmul.f32 %v886, %v908
    %v934 = vmul.f32 %v889, %v908
    %v935 = vmul.f32 %v892, %v908
    %v936 = vmul.f32 %v895, %v908
    %v937 = vmul.f32 %v898, %v908
    %v938 = vmul.f32 %v901, %v908
    %v939 = vmul.f32 %v904, %v908
    %v940 = vmul.f32 %v907, %v908
    %vm941 = vcmask 1040384
    %v942 = vsel %vm941, %v910, 0.0
    %v943 = vadd.f32 %v909, %v942
    %v944 = vrot.slane %v943, 4
    %v945 = vadd.f32 %v943, %v944
    %v946 = vrot.slane %v945, 2
    %v947 = vadd.f32 %v945, %v946
    %v948 = vrot.slane %v947, 1
    %v949 = vadd.f32 %v947, %v948
    %v950 = vsel %vm941, %v912, 0.0
    %v951 = vadd.f32 %v911, %v950
    %v952 = vrot.slane %v951, 4
    %v953 = vadd.f32 %v951, %v952
    %v954 = vrot.slane %v953, 2
    %v955 = vadd.f32 %v953, %v954
    %v956 = vrot.slane %v955, 1
    %v957 = vadd.f32 %v955, %v956
    %v958 = vsel %vm941, %v914, 0.0
    %v959 = vadd.f32 %v913, %v958
    %v960 = vrot.slane %v959, 4
    %v961 = vadd.f32 %v959, %v960
    %v962 = vrot.slane %v961, 2
    %v963 = vadd.f32 %v961, %v962
    %v964 = vrot.slane %v963, 1
    %v965 = vadd.f32 %v963, %v964
    %v966 = vsel %vm941, %v916, 0.0
    %v967 = vadd.f32 %v915, %v966
    %v968 = vrot.slane %v967, 4
    %v969 = vadd.f32 %v967, %v968
    %v970 = vrot.slane %v969, 2
    %v971 = vadd.f32 %v969, %v970
    %v972 = vrot.slane %v971, 1
    %v973 = vadd.f32 %v971, %v972
    %v974 = vsel %vm941, %v918, 0.0
    %v975 = vadd.f32 %v917, %v974
    %v976 = vrot.slane %v975, 4
    %v977 = vadd.f32 %v975, %v976
    %v978 = vrot.slane %v977, 2
    %v979 = vadd.f32 %v977, %v978
    %v980 = vrot.slane %v979, 1
    %v981 = vadd.f32 %v979, %v980
    %v982 = vsel %vm941, %v920, 0.0
    %v983 = vadd.f32 %v919, %v982
    %v984 = vrot.slane %v983, 4
    %v985 = vadd.f32 %v983, %v984
    %v986 = vrot.slane %v985, 2
    %v987 = vadd.f32 %v985, %v986
    %v988 = vrot.slane %v987, 1
    %v989 = vadd.f32 %v987, %v988
    %v990 = vsel %vm941, %v922, 0.0
    %v991 = vadd.f32 %v921, %v990
    %v992 = vrot.slane %v991, 4
    %v993 = vadd.f32 %v991, %v992
    %v994 = vrot.slane %v993, 2
    %v995 = vadd.f32 %v993, %v994
    %v996 = vrot.slane %v995, 1
    %v997 = vadd.f32 %v995, %v996
    %v998 = vsel %vm941, %v924, 0.0
    %v999 = vadd.f32 %v923, %v998
    %v1000 = vrot.slane %v999, 4
    %v1001 = vadd.f32 %v999, %v1000
    %v1002 = vrot.slane %v1001, 2
    %v1003 = vadd.f32 %v1001, %v1002
    %v1004 = vrot.slane %v1003, 1
    %v1005 = vadd.f32 %v1003, %v1004
    %v1006 = vsel %vm941, %v926, 0.0
    %v1007 = vadd.f32 %v925, %v1006
    %v1008 = vrot.slane %v1007, 4
    %v1009 = vadd.f32 %v1007, %v1008
    %v1010 = vrot.slane %v1009, 2
    %v1011 = vadd.f32 %v1009, %v1010
    %v1012 = vrot.slane %v1011, 1
    %v1013 = vadd.f32 %v1011, %v1012
    %v1014 = vsel %vm941, %v928, 0.0
    %v1015 = vadd.f32 %v927, %v1014
    %v1016 = vrot.slane %v1015, 4
    %v1017 = vadd.f32 %v1015, %v1016
    %v1018 = vrot.slane %v1017, 2
    %v1019 = vadd.f32 %v1017, %v1018
    %v1020 = vrot.slane %v1019, 1
    %v1021 = vadd.f32 %v1019, %v1020
    %v1022 = vsel %vm941, %v930, 0.0
    %v1023 = vadd.f32 %v929, %v1022
    %v1024 = vrot.slane %v1023, 4
    %v1025 = vadd.f32 %v1023, %v1024
    %v1026 = vrot.slane %v1025, 2
    %v1027 = vadd.f32 %v1025, %v1026
    %v1028 = vrot.slane %v1027, 1
    %v1029 = vadd.f32 %v1027, %v1028
    %v1030 = vsel %vm941, %v932, 0.0
    %v1031 = vadd.f32 %v931, %v1030
    %v1032 = vrot.slane %v1031, 4
    %v1033 = vadd.f32 %v1031, %v1032
    %v1034 = vrot.slane %v1033, 2
    %v1035 = vadd.f32 %v1033, %v1034
    %v1036 = vrot.slane %v1035, 1
    %v1037 = vadd.f32 %v1035, %v1036
    %v1038 = vsel %vm941, %v934, 0.0
    %v1039 = vadd.f32 %v933, %v1038
    %v1040 = vrot.slane %v1039, 4
    %v1041 = vadd.f32 %v1039, %v1040
    %v1042 = vrot.slane %v1041, 2
    %v1043 = vadd.f32 %v1041, %v1042
    %v1044 = vrot.slane %v1043, 1
    %v1045 = vadd.f32 %v1043, %v1044
    %v1046 = vsel %vm941, %v936, 0.0
    %v1047 = vadd.f32 %v935, %v1046
    %v1048 = vrot.slane %v1047, 4
    %v1049 = vadd.f32 %v1047, %v1048
    %v1050 = vrot.slane %v1049, 2
    %v1051 = vadd.f32 %v1049, %v1050
    %v1052 = vrot.slane %v1051, 1
    %v1053 = vadd.f32 %v1051, %v1052
    %v1054 = vsel %vm941, %v938, 0.0
    %v1055 = vadd.f32 %v937, %v1054
    %v1056 = vrot.slane %v1055, 4
    %v1057 = vadd.f32 %v1055, %v1056
    %v1058 = vrot.slane %v1057, 2
    %v1059 = vadd.f32 %v1057, %v1058
    %v1060 = vrot.slane %v1059, 1
    %v1061 = vadd.f32 %v1059, %v1060
    %v1062 = vsel %vm941, %v940, 0.0
    %v1063 = vadd.f32 %v939, %v1062
    %v1064 = vrot.slane %v1063, 4
    %v1065 = vadd.f32 %v1063, %v1064
    %v1066 = vrot.slane %v1065, 2
    %v1067 = vadd.f32 %v1065, %v1066
    %v1068 = vrot.slane %v1067, 1
    %v1069 = vadd.f32 %v1067, %v1068
    %v1070 = vrcp.pop 9.0
    %v1071 = vmul.f32 %v949, %v1070
    %v1072 = vmul.f32 %v957, %v1070
    %v1073 = vmul.f32 %v965, %v1070
    %v1074 = vmul.f32 %v973, %v1070
    %v1075 = vmul.f32 %v981, %v1070
    %v1076 = vmul.f32 %v989, %v1070
    %v1077 = vmul.f32 %v997, %v1070
    %v1078 = vmul.f32 %v1005, %v1070
    %v1079 = vmul.f32 %v1013, %v1070
    %v1080 = vmul.f32 %v1021, %v1070
    %v1081 = vmul.f32 %v1029, %v1070
    %v1082 = vmul.f32 %v1037, %v1070
    %v1083 = vmul.f32 %v1045, %v1070
    %v1084 = vmul.f32 %v1053, %v1070
    %v1085 = vmul.f32 %v1061, %v1070
    %v1086 = vmul.f32 %v1069, %v1070
    %v1087 = vsub.f32 %v778, %v1071
    %v1088 = vsub.f32 %v779, %v1071
    %v1089 = vsub.f32 %v780, %v1072
    %v1090 = vsub.f32 %v781, %v1072
    %v1091 = vsub.f32 %v782, %v1073
    %v1092 = vsub.f32 %v783, %v1073
    %v1093 = vsub.f32 %v784, %v1074
    %v1094 = vsub.f32 %v785, %v1074
    %v1095 = vsub.f32 %v786, %v1075
    %v1096 = vsub.f32 %v787, %v1075
    %v1097 = vsub.f32 %v788, %v1076
    %v1098 = vsub.f32 %v789, %v1076
    %v1099 = vsub.f32 %v790, %v1077
    %v1100 = vsub.f32 %v791, %v1077
    %v1101 = vsub.f32 %v792, %v1078
    %v1102 = vsub.f32 %v793, %v1078
    %v1103 = vsub.f32 %v794, %v1079
    %v1104 = vsub.f32 %v795, %v1079
    %v1105 = vsub.f32 %v796, %v1080
    %v1106 = vsub.f32 %v797, %v1080
    %v1107 = vsub.f32 %v798, %v1081
    %v1108 = vsub.f32 %v799, %v1081
    %v1109 = vsub.f32 %v800, %v1082
    %v1110 = vsub.f32 %v801, %v1082
    %v1111 = vsub.f32 %v802, %v1083
    %v1112 = vsub.f32 %v803, %v1083
    %v1113 = vsub.f32 %v804, %v1084
    %v1114 = vsub.f32 %v805, %v1084
    %v1115 = vsub.f32 %v806, %v1085
    %v1116 = vsub.f32 %v807, %v1085
    %v1117 = vsub.f32 %v808, %v1086
    %v1118 = vsub.f32 %v809, %v1086
    %v1119 = vmul.f32 %v1087, %v1087
    %v1120 = vmul.f32 %v1088, %v1088
    %v1121 = vmul.f32 %v1089, %v1089
    %v1122 = vmul.f32 %v1090, %v1090
    %v1123 = vmul.f32 %v1091, %v1091
    %v1124 = vmul.f32 %v1092, %v1092
    %v1125 = vmul.f32 %v1093, %v1093
    %v1126 = vmul.f32 %v1094, %v1094
    %v1127 = vmul.f32 %v1095, %v1095
    %v1128 = vmul.f32 %v1096, %v1096
    %v1129 = vmul.f32 %v1097, %v1097
    %v1130 = vmul.f32 %v1098, %v1098
    %v1131 = vmul.f32 %v1099, %v1099
    %v1132 = vmul.f32 %v1100, %v1100
    %v1133 = vmul.f32 %v1101, %v1101
    %v1134 = vmul.f32 %v1102, %v1102
    %v1135 = vmul.f32 %v1103, %v1103
    %v1136 = vmul.f32 %v1104, %v1104
    %v1137 = vmul.f32 %v1105, %v1105
    %v1138 = vmul.f32 %v1106, %v1106
    %v1139 = vmul.f32 %v1107, %v1107
    %v1140 = vmul.f32 %v1108, %v1108
    %v1141 = vmul.f32 %v1109, %v1109
    %v1142 = vmul.f32 %v1110, %v1110
    %v1143 = vmul.f32 %v1111, %v1111
    %v1144 = vmul.f32 %v1112, %v1112
    %v1145 = vmul.f32 %v1113, %v1113
    %v1146 = vmul.f32 %v1114, %v1114
    %v1147 = vmul.f32 %v1115, %v1115
    %v1148 = vmul.f32 %v1116, %v1116
    %v1149 = vmul.f32 %v1117, %v1117
    %v1150 = vmul.f32 %v1118, %v1118
    %v1151 = vsel %vm810, %v1119, 0.0
    %1152 = vadd.xlane.f32.xlu0 %v1151
    %v1153 = vpop.xlane.xlu0 %1152
    %v1154 = vsel %vm814, %v1120, 0.0
    %1155 = vadd.xlane.f32.xlu0 %v1154
    %v1156 = vpop.xlane.xlu0 %1155
    %v1157 = vsel %vm810, %v1121, 0.0
    %1158 = vadd.xlane.f32.xlu0 %v1157
    %v1159 = vpop.xlane.xlu0 %1158
    %v1160 = vsel %vm814, %v1122, 0.0
    %1161 = vadd.xlane.f32.xlu0 %v1160
    %v1162 = vpop.xlane.xlu0 %1161
    %v1163 = vsel %vm810, %v1123, 0.0
    %1164 = vadd.xlane.f32.xlu0 %v1163
    %v1165 = vpop.xlane.xlu0 %1164
    %v1166 = vsel %vm814, %v1124, 0.0
    %1167 = vadd.xlane.f32.xlu0 %v1166
    %v1168 = vpop.xlane.xlu0 %1167
    %v1169 = vsel %vm810, %v1125, 0.0
    %1170 = vadd.xlane.f32.xlu0 %v1169
    %v1171 = vpop.xlane.xlu0 %1170
    %v1172 = vsel %vm814, %v1126, 0.0
    %1173 = vadd.xlane.f32.xlu0 %v1172
    %v1174 = vpop.xlane.xlu0 %1173
    %v1175 = vsel %vm810, %v1127, 0.0
    %1176 = vadd.xlane.f32.xlu0 %v1175
    %v1177 = vpop.xlane.xlu0 %1176
    %v1178 = vsel %vm814, %v1128, 0.0
    %1179 = vadd.xlane.f32.xlu0 %v1178
    %v1180 = vpop.xlane.xlu0 %1179
    %v1181 = vsel %vm810, %v1129, 0.0
    %1182 = vadd.xlane.f32.xlu0 %v1181
    %v1183 = vpop.xlane.xlu0 %1182
    %v1184 = vsel %vm814, %v1130, 0.0
    %1185 = vadd.xlane.f32.xlu0 %v1184
    %v1186 = vpop.xlane.xlu0 %1185
    %v1187 = vsel %vm810, %v1131, 0.0
    %1188 = vadd.xlane.f32.xlu0 %v1187
    %v1189 = vpop.xlane.xlu0 %1188
    %v1190 = vsel %vm814, %v1132, 0.0
    %1191 = vadd.xlane.f32.xlu0 %v1190
    %v1192 = vpop.xlane.xlu0 %1191
    %v1193 = vsel %vm810, %v1133, 0.0
    %1194 = vadd.xlane.f32.xlu0 %v1193
    %v1195 = vpop.xlane.xlu0 %1194
    %v1196 = vsel %vm814, %v1134, 0.0
    %1197 = vadd.xlane.f32.xlu0 %v1196
    %v1198 = vpop.xlane.xlu0 %1197
    %v1199 = vsel %vm810, %v1135, 0.0
    %1200 = vadd.xlane.f32.xlu0 %v1199
    %v1201 = vpop.xlane.xlu0 %1200
    %v1202 = vsel %vm814, %v1136, 0.0
    %1203 = vadd.xlane.f32.xlu0 %v1202
    %v1204 = vpop.xlane.xlu0 %1203
    %v1205 = vsel %vm810, %v1137, 0.0
    %1206 = vadd.xlane.f32.xlu0 %v1205
    %v1207 = vpop.xlane.xlu0 %1206
    %v1208 = vsel %vm814, %v1138, 0.0
    %1209 = vadd.xlane.f32.xlu0 %v1208
    %v1210 = vpop.xlane.xlu0 %1209
    %v1211 = vsel %vm810, %v1139, 0.0
    %1212 = vadd.xlane.f32.xlu0 %v1211
    %v1213 = vpop.xlane.xlu0 %1212
    %v1214 = vsel %vm814, %v1140, 0.0
    %1215 = vadd.xlane.f32.xlu0 %v1214
    %v1216 = vpop.xlane.xlu0 %1215
    %v1217 = vsel %vm810, %v1141, 0.0
    %1218 = vadd.xlane.f32.xlu0 %v1217
    %v1219 = vpop.xlane.xlu0 %1218
    %v1220 = vsel %vm814, %v1142, 0.0
    %1221 = vadd.xlane.f32.xlu0 %v1220
    %v1222 = vpop.xlane.xlu0 %1221
    %v1223 = vsel %vm810, %v1143, 0.0
    %1224 = vadd.xlane.f32.xlu0 %v1223
    %v1225 = vpop.xlane.xlu0 %1224
    %v1226 = vsel %vm814, %v1144, 0.0
    %1227 = vadd.xlane.f32.xlu0 %v1226
    %v1228 = vpop.xlane.xlu0 %1227
    %v1229 = vsel %vm810, %v1145, 0.0
    %1230 = vadd.xlane.f32.xlu0 %v1229
    %v1231 = vpop.xlane.xlu0 %1230
    %v1232 = vsel %vm814, %v1146, 0.0
    %1233 = vadd.xlane.f32.xlu0 %v1232
    %v1234 = vpop.xlane.xlu0 %1233
    %v1235 = vsel %vm810, %v1147, 0.0
    %1236 = vadd.xlane.f32.xlu0 %v1235
    %v1237 = vpop.xlane.xlu0 %1236
    %v1238 = vsel %vm814, %v1148, 0.0
    %1239 = vadd.xlane.f32.xlu0 %v1238
    %v1240 = vpop.xlane.xlu0 %1239
    %v1241 = vsel %vm810, %v1149, 0.0
    %1242 = vadd.xlane.f32.xlu0 %v1241
    %v1243 = vpop.xlane.xlu0 %1242
    %v1244 = vsel %vm814, %v1150, 0.0
    %1245 = vadd.xlane.f32.xlu0 %v1244
    %v1246 = vpop.xlane.xlu0 %1245
    %v1247 = vmul.f32 %v1153, %v908
    %v1248 = vmul.f32 %v1156, %v908
    %v1249 = vmul.f32 %v1159, %v908
    %v1250 = vmul.f32 %v1162, %v908
    %v1251 = vmul.f32 %v1165, %v908
    %v1252 = vmul.f32 %v1168, %v908
    %v1253 = vmul.f32 %v1171, %v908
    %v1254 = vmul.f32 %v1174, %v908
    %v1255 = vmul.f32 %v1177, %v908
    %v1256 = vmul.f32 %v1180, %v908
    %v1257 = vmul.f32 %v1183, %v908
    %v1258 = vmul.f32 %v1186, %v908
    %v1259 = vmul.f32 %v1189, %v908
    %v1260 = vmul.f32 %v1192, %v908
    %v1261 = vmul.f32 %v1195, %v908
    %v1262 = vmul.f32 %v1198, %v908
    %v1263 = vmul.f32 %v1201, %v908
    %v1264 = vmul.f32 %v1204, %v908
    %v1265 = vmul.f32 %v1207, %v908
    %v1266 = vmul.f32 %v1210, %v908
    %v1267 = vmul.f32 %v1213, %v908
    %v1268 = vmul.f32 %v1216, %v908
    %v1269 = vmul.f32 %v1219, %v908
    %v1270 = vmul.f32 %v1222, %v908
    %v1271 = vmul.f32 %v1225, %v908
    %v1272 = vmul.f32 %v1228, %v908
    %v1273 = vmul.f32 %v1231, %v908
    %v1274 = vmul.f32 %v1234, %v908
    %v1275 = vmul.f32 %v1237, %v908
    %v1276 = vmul.f32 %v1240, %v908
    %v1277 = vmul.f32 %v1243, %v908
    %v1278 = vmul.f32 %v1246, %v908
    %v1279 = vsel %vm941, %v1248, 0.0
    %v1280 = vadd.f32 %v1247, %v1279
    %v1281 = vrot.slane %v1280, 4
    %v1282 = vadd.f32 %v1280, %v1281
    %v1283 = vrot.slane %v1282, 2
    %v1284 = vadd.f32 %v1282, %v1283
    %v1285 = vrot.slane %v1284, 1
    %v1286 = vadd.f32 %v1284, %v1285
    %v1287 = vsel %vm941, %v1250, 0.0
    %v1288 = vadd.f32 %v1249, %v1287
    %v1289 = vrot.slane %v1288, 4
    %v1290 = vadd.f32 %v1288, %v1289
    %v1291 = vrot.slane %v1290, 2
    %v1292 = vadd.f32 %v1290, %v1291
    %v1293 = vrot.slane %v1292, 1
    %v1294 = vadd.f32 %v1292, %v1293
    %v1295 = vsel %vm941, %v1252, 0.0
    %v1296 = vadd.f32 %v1251, %v1295
    %v1297 = vrot.slane %v1296, 4
    %v1298 = vadd.f32 %v1296, %v1297
    %v1299 = vrot.slane %v1298, 2
    %v1300 = vadd.f32 %v1298, %v1299
    %v1301 = vrot.slane %v1300, 1
    %v1302 = vadd.f32 %v1300, %v1301
    %v1303 = vsel %vm941, %v1254, 0.0
    %v1304 = vadd.f32 %v1253, %v1303
    %v1305 = vrot.slane %v1304, 4
    %v1306 = vadd.f32 %v1304, %v1305
    %v1307 = vrot.slane %v1306, 2
    %v1308 = vadd.f32 %v1306, %v1307
    %v1309 = vrot.slane %v1308, 1
    %v1310 = vadd.f32 %v1308, %v1309
    %v1311 = vsel %vm941, %v1256, 0.0
    %v1312 = vadd.f32 %v1255, %v1311
    %v1313 = vrot.slane %v1312, 4
    %v1314 = vadd.f32 %v1312, %v1313
    %v1315 = vrot.slane %v1314, 2
    %v1316 = vadd.f32 %v1314, %v1315
    %v1317 = vrot.slane %v1316, 1
    %v1318 = vadd.f32 %v1316, %v1317
    %v1319 = vsel %vm941, %v1258, 0.0
    %v1320 = vadd.f32 %v1257, %v1319
    %v1321 = vrot.slane %v1320, 4
    %v1322 = vadd.f32 %v1320, %v1321
    %v1323 = vrot.slane %v1322, 2
    %v1324 = vadd.f32 %v1322, %v1323
    %v1325 = vrot.slane %v1324, 1
    %v1326 = vadd.f32 %v1324, %v1325
    %v1327 = vsel %vm941, %v1260, 0.0
    %v1328 = vadd.f32 %v1259, %v1327
    %v1329 = vrot.slane %v1328, 4
    %v1330 = vadd.f32 %v1328, %v1329
    %v1331 = vrot.slane %v1330, 2
    %v1332 = vadd.f32 %v1330, %v1331
    %v1333 = vrot.slane %v1332, 1
    %v1334 = vadd.f32 %v1332, %v1333
    %v1335 = vsel %vm941, %v1262, 0.0
    %v1336 = vadd.f32 %v1261, %v1335
    %v1337 = vrot.slane %v1336, 4
    %v1338 = vadd.f32 %v1336, %v1337
    %v1339 = vrot.slane %v1338, 2
    %v1340 = vadd.f32 %v1338, %v1339
    %v1341 = vrot.slane %v1340, 1
    %v1342 = vadd.f32 %v1340, %v1341
    %v1343 = vsel %vm941, %v1264, 0.0
    %v1344 = vadd.f32 %v1263, %v1343
    %v1345 = vrot.slane %v1344, 4
    %v1346 = vadd.f32 %v1344, %v1345
    %v1347 = vrot.slane %v1346, 2
    %v1348 = vadd.f32 %v1346, %v1347
    %v1349 = vrot.slane %v1348, 1
    %v1350 = vadd.f32 %v1348, %v1349
    %v1351 = vsel %vm941, %v1266, 0.0
    %v1352 = vadd.f32 %v1265, %v1351
    %v1353 = vrot.slane %v1352, 4
    %v1354 = vadd.f32 %v1352, %v1353
    %v1355 = vrot.slane %v1354, 2
    %v1356 = vadd.f32 %v1354, %v1355
    %v1357 = vrot.slane %v1356, 1
    %v1358 = vadd.f32 %v1356, %v1357
    %v1359 = vsel %vm941, %v1268, 0.0
    %v1360 = vadd.f32 %v1267, %v1359
    %v1361 = vrot.slane %v1360, 4
    %v1362 = vadd.f32 %v1360, %v1361
    %v1363 = vrot.slane %v1362, 2
    %v1364 = vadd.f32 %v1362, %v1363
    %v1365 = vrot.slane %v1364, 1
    %v1366 = vadd.f32 %v1364, %v1365
    %v1367 = vsel %vm941, %v1270, 0.0
    %v1368 = vadd.f32 %v1269, %v1367
    %v1369 = vrot.slane %v1368, 4
    %v1370 = vadd.f32 %v1368, %v1369
    %v1371 = vrot.slane %v1370, 2
    %v1372 = vadd.f32 %v1370, %v1371
    %v1373 = vrot.slane %v1372, 1
    %v1374 = vadd.f32 %v1372, %v1373
    %v1375 = vsel %vm941, %v1272, 0.0
    %v1376 = vadd.f32 %v1271, %v1375
    %v1377 = vrot.slane %v1376, 4
    %v1378 = vadd.f32 %v1376, %v1377
    %v1379 = vrot.slane %v1378, 2
    %v1380 = vadd.f32 %v1378, %v1379
    %v1381 = vrot.slane %v1380, 1
    %v1382 = vadd.f32 %v1380, %v1381
    %v1383 = vsel %vm941, %v1274, 0.0
    %v1384 = vadd.f32 %v1273, %v1383
    %v1385 = vrot.slane %v1384, 4
    %v1386 = vadd.f32 %v1384, %v1385
    %v1387 = vrot.slane %v1386, 2
    %v1388 = vadd.f32 %v1386, %v1387
    %v1389 = vrot.slane %v1388, 1
    %v1390 = vadd.f32 %v1388, %v1389
    %v1391 = vsel %vm941, %v1276, 0.0
    %v1392 = vadd.f32 %v1275, %v1391
    %v1393 = vrot.slane %v1392, 4
    %v1394 = vadd.f32 %v1392, %v1393
    %v1395 = vrot.slane %v1394, 2
    %v1396 = vadd.f32 %v1394, %v1395
    %v1397 = vrot.slane %v1396, 1
    %v1398 = vadd.f32 %v1396, %v1397
    %v1399 = vsel %vm941, %v1278, 0.0
    %v1400 = vadd.f32 %v1277, %v1399
    %v1401 = vrot.slane %v1400, 4
    %v1402 = vadd.f32 %v1400, %v1401
    %v1403 = vrot.slane %v1402, 2
    %v1404 = vadd.f32 %v1402, %v1403
    %v1405 = vrot.slane %v1404, 1
    %v1406 = vadd.f32 %v1404, %v1405
    %v1407 = vmul.f32 %v1286, %v1070
    %v1408 = vmul.f32 %v1294, %v1070
    %v1409 = vmul.f32 %v1302, %v1070
    %v1410 = vmul.f32 %v1310, %v1070
    %v1411 = vmul.f32 %v1318, %v1070
    %v1412 = vmul.f32 %v1326, %v1070
    %v1413 = vmul.f32 %v1334, %v1070
    %v1414 = vmul.f32 %v1342, %v1070
    %v1415 = vmul.f32 %v1350, %v1070
    %v1416 = vmul.f32 %v1358, %v1070
    %v1417 = vmul.f32 %v1366, %v1070
    %v1418 = vmul.f32 %v1374, %v1070
    %v1419 = vmul.f32 %v1382, %v1070
    %v1420 = vmul.f32 %v1390, %v1070
    %v1421 = vmul.f32 %v1398, %v1070
    %v1422 = vmul.f32 %v1406, %v1070
    %v1423 = vadd.f32 %v1407, 1e-05
    %v1424 = vadd.f32 %v1408, 1e-05
    %v1425 = vadd.f32 %v1409, 1e-05
    %v1426 = vadd.f32 %v1410, 1e-05
    %v1427 = vadd.f32 %v1411, 1e-05
    %v1428 = vadd.f32 %v1412, 1e-05
    %v1429 = vadd.f32 %v1413, 1e-05
    %v1430 = vadd.f32 %v1414, 1e-05
    %v1431 = vadd.f32 %v1415, 1e-05
    %v1432 = vadd.f32 %v1416, 1e-05
    %v1433 = vadd.f32 %v1417, 1e-05
    %v1434 = vadd.f32 %v1418, 1e-05
    %v1435 = vadd.f32 %v1419, 1e-05
    %v1436 = vadd.f32 %v1420, 1e-05
    %v1437 = vadd.f32 %v1421, 1e-05
    %v1438 = vadd.f32 %v1422, 1e-05
    %v1439 = vrsqrt.pop %v1423
    %v1440 = vrsqrt.pop %v1424
    %v1441 = vrsqrt.pop %v1425
    %v1442 = vrsqrt.pop %v1426
    %v1443 = vrsqrt.pop %v1427
    %v1444 = vrsqrt.pop %v1428
    %v1445 = vrsqrt.pop %v1429
    %v1446 = vrsqrt.pop %v1430
    %v1447 = vrsqrt.pop %v1431
    %v1448 = vrsqrt.pop %v1432
    %v1449 = vrsqrt.pop %v1433
    %v1450 = vrsqrt.pop %v1434
    %v1451 = vrsqrt.pop %v1435
    %v1452 = vrsqrt.pop %v1436
    %v1453 = vrsqrt.pop %v1437
    %v1454 = vrsqrt.pop %v1438
    %v1455 = vmul.f32 %v1087, %v1439
    %v1456 = vmul.f32 %v1088, %v1439
    %v1457 = vmul.f32 %v1089, %v1440
    %v1458 = vmul.f32 %v1090, %v1440
    %v1459 = vmul.f32 %v1091, %v1441
    %v1460 = vmul.f32 %v1092, %v1441
    %v1461 = vmul.f32 %v1093, %v1442
    %v1462 = vmul.f32 %v1094, %v1442
    %v1463 = vmul.f32 %v1095, %v1443
    %v1464 = vmul.f32 %v1096, %v1443
    %v1465 = vmul.f32 %v1097, %v1444
    %v1466 = vmul.f32 %v1098, %v1444
    %v1467 = vmul.f32 %v1099, %v1445
    %v1468 = vmul.f32 %v1100, %v1445
    %v1469 = vmul.f32 %v1101, %v1446
    %v1470 = vmul.f32 %v1102, %v1446
    %v1471 = vmul.f32 %v1103, %v1447
    %v1472 = vmul.f32 %v1104, %v1447
    %v1473 = vmul.f32 %v1105, %v1448
    %v1474 = vmul.f32 %v1106, %v1448
    %v1475 = vmul.f32 %v1107, %v1449
    %v1476 = vmul.f32 %v1108, %v1449
    %v1477 = vmul.f32 %v1109, %v1450
    %v1478 = vmul.f32 %v1110, %v1450
    %v1479 = vmul.f32 %v1111, %v1451
    %v1480 = vmul.f32 %v1112, %v1451
    %v1481 = vmul.f32 %v1113, %v1452
    %v1482 = vmul.f32 %v1114, %v1452
    %v1483 = vmul.f32 %v1115, %v1453
    %v1484 = vmul.f32 %v1116, %v1453
    %v1485 = vmul.f32 %v1117, %v1454
    %v1486 = vmul.f32 %v1118, %v1454
    %s1487 = sld [smem:[#allocation2 + $0x1]]
    %v1488 = vstv %s1487
    %v1489 = vmul.f32 %v1455, %v1488
    %v1490 = vmul.f32 %v1456, %v1488
    %v1491 = vmul.f32 %v1457, %v1488
    %v1492 = vmul.f32 %v1458, %v1488
    %v1493 = vmul.f32 %v1459, %v1488
    %v1494 = vmul.f32 %v1460, %v1488
    %v1495 = vmul.f32 %v1461, %v1488
    %v1496 = vmul.f32 %v1462, %v1488
    %v1497 = vmul.f32 %v1463, %v1488
    %v1498 = vmul.f32 %v1464, %v1488
    %v1499 = vmul.f32 %v1465, %v1488
    %v1500 = vmul.f32 %v1466, %v1488
    %v1501 = vmul.f32 %v1467, %v1488
    %v1502 = vmul.f32 %v1468, %v1488
    %v1503 = vmul.f32 %v1469, %v1488
    %v1504 = vmul.f32 %v1470, %v1488
    %v1505 = vmul.f32 %v1471, %v1488
    %v1506 = vmul.f32 %v1472, %v1488
    %v1507 = vmul.f32 %v1473, %v1488
    %v1508 = vmul.f32 %v1474, %v1488
    %v1509 = vmul.f32 %v1475, %v1488
    %v1510 = vmul.f32 %v1476, %v1488
    %v1511 = vmul.f32 %v1477, %v1488
    %v1512 = vmul.f32 %v1478, %v1488
    %v1513 = vmul.f32 %v1479, %v1488
    %v1514 = vmul.f32 %v1480, %v1488
    %v1515 = vmul.f32 %v1481, %v1488
    %v1516 = vmul.f32 %v1482, %v1488
    %v1517 = vmul.f32 %v1483, %v1488
    %v1518 = vmul.f32 %v1484, %v1488
    %v1519 = vmul.f32 %v1485, %v1488
    %v1520 = vmul.f32 %v1486, %v1488
    %s1521 = sld [smem:[#allocation2 + $0x2]]
    %v1522 = vstv %s1521
    %v1523 = vadd.f32 %v1489, %v1522
    %v1524 = vadd.f32 %v1490, %v1522
    %v1525 = vadd.f32 %v1491, %v1522
    %v1526 = vadd.f32 %v1492, %v1522
    %v1527 = vadd.f32 %v1493, %v1522
    %v1528 = vadd.f32 %v1494, %v1522
    %v1529 = vadd.f32 %v1495, %v1522
    %v1530 = vadd.f32 %v1496, %v1522
    %v1531 = vadd.f32 %v1497, %v1522
    %v1532 = vadd.f32 %v1498, %v1522
    %v1533 = vadd.f32 %v1499, %v1522
    %v1534 = vadd.f32 %v1500, %v1522
    %v1535 = vadd.f32 %v1501, %v1522
    %v1536 = vadd.f32 %v1502, %v1522
    %v1537 = vadd.f32 %v1503, %v1522
    %v1538 = vadd.f32 %v1504, %v1522
    %v1539 = vadd.f32 %v1505, %v1522
    %v1540 = vadd.f32 %v1506, %v1522
    %v1541 = vadd.f32 %v1507, %v1522
    %v1542 = vadd.f32 %v1508, %v1522
    %v1543 = vadd.f32 %v1509, %v1522
    %v1544 = vadd.f32 %v1510, %v1522
    %v1545 = vadd.f32 %v1511, %v1522
    %v1546 = vadd.f32 %v1512, %v1522
    %v1547 = vadd.f32 %v1513, %v1522
    %v1548 = vadd.f32 %v1514, %v1522
    %v1549 = vadd.f32 %v1515, %v1522
    %v1550 = vadd.f32 %v1516, %v1522
    %v1551 = vadd.f32 %v1517, %v1522
    %v1552 = vadd.f32 %v1518, %v1522
    %v1553 = vadd.f32 %v1519, %v1522
    %v1554 = vadd.f32 %v1520, %v1522
    %v1555 = vlaneseq
    %v1556 = vshrl.u32 %v1555, 7
    %v1557 = vsub.s32 0, %v1556
    %v1558 = vrot.slane %v775, %v1557
    %1560 = vbcast.lane.b32.xlu0 %v1558, 256
    %v1561 = vpop.permute.xlu0 %1560
    %s1563 = sor.u32 256, 8
    %1564 = vbcast.lane.b32.xlu0 %v1558, %s1563
    %v1565 = vpop.permute.xlu0 %1564
    %v1566 = vlaneseq
    %v1567 = vshrl.u32 %v1566, 7
    %v1568 = vsub.s32 1, %v1567
    %v1569 = vrot.slane %v775, %v1568
    %1571 = vbcast.lane.b32.xlu0 %v1569, 256
    %v1572 = vpop.permute.xlu0 %1571
    %s1574 = sor.u32 256, 8
    %1575 = vbcast.lane.b32.xlu0 %v1569, %s1574
    %v1576 = vpop.permute.xlu0 %1575
    %v1577 = vlaneseq
    %v1578 = vshrl.u32 %v1577, 7
    %v1579 = vsub.s32 2, %v1578
    %v1580 = vrot.slane %v775, %v1579
    %1582 = vbcast.lane.b32.xlu0 %v1580, 256
    %v1583 = vpop.permute.xlu0 %1582
    %s1585 = sor.u32 256, 8
    %1586 = vbcast.lane.b32.xlu0 %v1580, %s1585
    %v1587 = vpop.permute.xlu0 %1586
    %v1588 = vlaneseq
    %v1589 = vshrl.u32 %v1588, 7
    %v1590 = vsub.s32 3, %v1589
    %v1591 = vrot.slane %v775, %v1590
    %1593 = vbcast.lane.b32.xlu0 %v1591, 256
    %v1594 = vpop.permute.xlu0 %1593
    %s1596 = sor.u32 256, 8
    %1597 = vbcast.lane.b32.xlu0 %v1591, %s1596
    %v1598 = vpop.permute.xlu0 %1597
    %v1599 = vlaneseq
    %v1600 = vshrl.u32 %v1599, 7
    %v1601 = vsub.s32 4, %v1600
    %v1602 = vrot.slane %v775, %v1601
    %1604 = vbcast.lane.b32.xlu0 %v1602, 256
    %v1605 = vpop.permute.xlu0 %1604
    %s1607 = sor.u32 256, 8
    %1608 = vbcast.lane.b32.xlu0 %v1602, %s1607
    %v1609 = vpop.permute.xlu0 %1608
    %v1610 = vlaneseq
    %v1611 = vshrl.u32 %v1610, 7
    %v1612 = vsub.s32 5, %v1611
    %v1613 = vrot.slane %v775, %v1612
    %1615 = vbcast.lane.b32.xlu0 %v1613, 256
    %v1616 = vpop.permute.xlu0 %1615
    %s1618 = sor.u32 256, 8
    %1619 = vbcast.lane.b32.xlu0 %v1613, %s1618
    %v1620 = vpop.permute.xlu0 %1619
    %v1621 = vlaneseq
    %v1622 = vshrl.u32 %v1621, 7
    %v1623 = vsub.s32 6, %v1622
    %v1624 = vrot.slane %v775, %v1623
    %1626 = vbcast.lane.b32.xlu0 %v1624, 256
    %v1627 = vpop.permute.xlu0 %1626
    %s1629 = sor.u32 256, 8
    %1630 = vbcast.lane.b32.xlu0 %v1624, %s1629
    %v1631 = vpop.permute.xlu0 %1630
    %v1632 = vlaneseq
    %v1633 = vshrl.u32 %v1632, 7
    %v1634 = vsub.s32 7, %v1633
    %v1635 = vrot.slane %v775, %v1634
    %1637 = vbcast.lane.b32.xlu0 %v1635, 256
    %v1638 = vpop.permute.xlu0 %1637
    %s1640 = sor.u32 256, 8
    %1641 = vbcast.lane.b32.xlu0 %v1635, %s1640
    %v1642 = vpop.permute.xlu0 %1641
    %v1643 = vlaneseq
    %v1644 = vshrl.u32 %v1643, 7
    %v1645 = vsub.s32 0, %v1644
    %v1646 = vrot.slane %v777, %v1645
    %1648 = vbcast.lane.b32.xlu0 %v1646, 256
    %v1649 = vpop.permute.xlu0 %1648
    %s1651 = sor.u32 256, 8
    %1652 = vbcast.lane.b32.xlu0 %v1646, %s1651
    %v1653 = vpop.permute.xlu0 %1652
    %v1654 = vlaneseq
    %v1655 = vshrl.u32 %v1654, 7
    %v1656 = vsub.s32 1, %v1655
    %v1657 = vrot.slane %v777, %v1656
    %1659 = vbcast.lane.b32.xlu0 %v1657, 256
    %v1660 = vpop.permute.xlu0 %1659
    %s1662 = sor.u32 256, 8
    %1663 = vbcast.lane.b32.xlu0 %v1657, %s1662
    %v1664 = vpop.permute.xlu0 %1663
    %v1665 = vlaneseq
    %v1666 = vshrl.u32 %v1665, 7
    %v1667 = vsub.s32 2, %v1666
    %v1668 = vrot.slane %v777, %v1667
    %1670 = vbcast.lane.b32.xlu0 %v1668, 256
    %v1671 = vpop.permute.xlu0 %1670
    %s1673 = sor.u32 256, 8
    %1674 = vbcast.lane.b32.xlu0 %v1668, %s1673
    %v1675 = vpop.permute.xlu0 %1674
    %v1676 = vlaneseq
    %v1677 = vshrl.u32 %v1676, 7
    %v1678 = vsub.s32 3, %v1677
    %v1679 = vrot.slane %v777, %v1678
    %1681 = vbcast.lane.b32.xlu0 %v1679, 256
    %v1682 = vpop.permute.xlu0 %1681
    %s1684 = sor.u32 256, 8
    %1685 = vbcast.lane.b32.xlu0 %v1679, %s1684
    %v1686 = vpop.permute.xlu0 %1685
    %v1687 = vlaneseq
    %v1688 = vshrl.u32 %v1687, 7
    %v1689 = vsub.s32 4, %v1688
    %v1690 = vrot.slane %v777, %v1689
    %1692 = vbcast.lane.b32.xlu0 %v1690, 256
    %v1693 = vpop.permute.xlu0 %1692
    %s1695 = sor.u32 256, 8
    %1696 = vbcast.lane.b32.xlu0 %v1690, %s1695
    %v1697 = vpop.permute.xlu0 %1696
    %v1698 = vlaneseq
    %v1699 = vshrl.u32 %v1698, 7
    %v1700 = vsub.s32 5, %v1699
    %v1701 = vrot.slane %v777, %v1700
    %1703 = vbcast.lane.b32.xlu0 %v1701, 256
    %v1704 = vpop.permute.xlu0 %1703
    %s1706 = sor.u32 256, 8
    %1707 = vbcast.lane.b32.xlu0 %v1701, %s1706
    %v1708 = vpop.permute.xlu0 %1707
    %v1709 = vlaneseq
    %v1710 = vshrl.u32 %v1709, 7
    %v1711 = vsub.s32 6, %v1710
    %v1712 = vrot.slane %v777, %v1711
    %1714 = vbcast.lane.b32.xlu0 %v1712, 256
    %v1715 = vpop.permute.xlu0 %1714
    %s1717 = sor.u32 256, 8
    %1718 = vbcast.lane.b32.xlu0 %v1712, %s1717
    %v1719 = vpop.permute.xlu0 %1718
    %v1720 = vlaneseq
    %v1721 = vshrl.u32 %v1720, 7
    %v1722 = vsub.s32 7, %v1721
    %v1723 = vrot.slane %v777, %v1722
    %1725 = vbcast.lane.b32.xlu0 %v1723, 256
    %v1726 = vpop.permute.xlu0 %1725
    %s1728 = sor.u32 256, 8
    %1729 = vbcast.lane.b32.xlu0 %v1723, %s1728
    %v1730 = vpop.permute.xlu0 %1729
    %v1731 = vmul.f32 %v1523, %v1561
    %v1732 = vmul.f32 %v1524, %v1565
    %v1733 = vmul.f32 %v1525, %v1572
    %v1734 = vmul.f32 %v1526, %v1576
    %v1735 = vmul.f32 %v1527, %v1583
    %v1736 = vmul.f32 %v1528, %v1587
    %v1737 = vmul.f32 %v1529, %v1594
    %v1738 = vmul.f32 %v1530, %v1598
    %v1739 = vmul.f32 %v1531, %v1605
    %v1740 = vmul.f32 %v1532, %v1609
    %v1741 = vmul.f32 %v1533, %v1616
    %v1742 = vmul.f32 %v1534, %v1620
    %v1743 = vmul.f32 %v1535, %v1627
    %v1744 = vmul.f32 %v1536, %v1631
    %v1745 = vmul.f32 %v1537, %v1638
    %v1746 = vmul.f32 %v1538, %v1642
    %v1747 = vmul.f32 %v1539, %v1649
    %v1748 = vmul.f32 %v1540, %v1653
    %v1749 = vmul.f32 %v1541, %v1660
    %v1750 = vmul.f32 %v1542, %v1664
    %v1751 = vmul.f32 %v1543, %v1671
    %v1752 = vmul.f32 %v1544, %v1675
    %v1753 = vmul.f32 %v1545, %v1682
    %v1754 = vmul.f32 %v1546, %v1686
    %v1755 = vmul.f32 %v1547, %v1693
    %v1756 = vmul.f32 %v1548, %v1697
    %v1757 = vmul.f32 %v1549, %v1704
    %v1758 = vmul.f32 %v1550, %v1708
    %v1759 = vmul.f32 %v1551, %v1715
    %v1760 = vmul.f32 %v1552, %v1719
    %v1761 = vmul.f32 %v1553, %v1726
    %v1762 = vmul.f32 %v1554, %v1730
    %v1763 = vsel %vm810, %v1731, 0.0
    %v1764 = vsel %vm814, %v1732, 0.0
    %v1765 = vadd.f32 %v1763, %v1764
    %v1766 = vrot.slane %v1765, 4
    %v1767 = vadd.f32 %v1765, %v1766
    %v1768 = vrot.slane %v1767, 2
    %v1769 = vadd.f32 %v1767, %v1768
    %v1770 = vrot.slane %v1769, 1
    %v1771 = vadd.f32 %v1769, %v1770
    %v1772 = vsel %vm810, %v1733, 0.0
    %v1773 = vsel %vm814, %v1734, 0.0
    %v1774 = vadd.f32 %v1772, %v1773
    %v1775 = vrot.slane %v1774, 4
    %v1776 = vadd.f32 %v1774, %v1775
    %v1777 = vrot.slane %v1776, 2
    %v1778 = vadd.f32 %v1776, %v1777
    %v1779 = vrot.slane %v1778, 1
    %v1780 = vadd.f32 %v1778, %v1779
    %v1781 = vsel %vm810, %v1735, 0.0
    %v1782 = vsel %vm814, %v1736, 0.0
    %v1783 = vadd.f32 %v1781, %v1782
    %v1784 = vrot.slane %v1783, 4
    %v1785 = vadd.f32 %v1783, %v1784
    %v1786 = vrot.slane %v1785, 2
    %v1787 = vadd.f32 %v1785, %v1786
    %v1788 = vrot.slane %v1787, 1
    %v1789 = vadd.f32 %v1787, %v1788
    %v1790 = vsel %vm810, %v1737, 0.0
    %v1791 = vsel %vm814, %v1738, 0.0
    %v1792 = vadd.f32 %v1790, %v1791
    %v1793 = vrot.slane %v1792, 4
    %v1794 = vadd.f32 %v1792, %v1793
    %v1795 = vrot.slane %v1794, 2
    %v1796 = vadd.f32 %v1794, %v1795
    %v1797 = vrot.slane %v1796, 1
    %v1798 = vadd.f32 %v1796, %v1797
    %v1799 = vsel %vm810, %v1739, 0.0
    %v1800 = vsel %vm814, %v1740, 0.0
    %v1801 = vadd.f32 %v1799, %v1800
    %v1802 = vrot.slane %v1801, 4
    %v1803 = vadd.f32 %v1801, %v1802
    %v1804 = vrot.slane %v1803, 2
    %v1805 = vadd.f32 %v1803, %v1804
    %v1806 = vrot.slane %v1805, 1
    %v1807 = vadd.f32 %v1805, %v1806
    %v1808 = vsel %vm810, %v1741, 0.0
    %v1809 = vsel %vm814, %v1742, 0.0
    %v1810 = vadd.f32 %v1808, %v1809
    %v1811 = vrot.slane %v1810, 4
    %v1812 = vadd.f32 %v1810, %v1811
    %v1813 = vrot.slane %v1812, 2
    %v1814 = vadd.f32 %v1812, %v1813
    %v1815 = vrot.slane %v1814, 1
    %v1816 = vadd.f32 %v1814, %v1815
    %v1817 = vsel %vm810, %v1743, 0.0
    %v1818 = vsel %vm814, %v1744, 0.0
    %v1819 = vadd.f32 %v1817, %v1818
    %v1820 = vrot.slane %v1819, 4
    %v1821 = vadd.f32 %v1819, %v1820
    %v1822 = vrot.slane %v1821, 2
    %v1823 = vadd.f32 %v1821, %v1822
    %v1824 = vrot.slane %v1823, 1
    %v1825 = vadd.f32 %v1823, %v1824
    %v1826 = vsel %vm810, %v1745, 0.0
    %v1827 = vsel %vm814, %v1746, 0.0
    %v1828 = vadd.f32 %v1826, %v1827
    %v1829 = vrot.slane %v1828, 4
    %v1830 = vadd.f32 %v1828, %v1829
    %v1831 = vrot.slane %v1830, 2
    %v1832 = vadd.f32 %v1830, %v1831
    %v1833 = vrot.slane %v1832, 1
    %v1834 = vadd.f32 %v1832, %v1833
    %v1835 = vsel %vm810, %v1747, 0.0
    %v1836 = vsel %vm814, %v1748, 0.0
    %v1837 = vadd.f32 %v1835, %v1836
    %v1838 = vrot.slane %v1837, 4
    %v1839 = vadd.f32 %v1837, %v1838
    %v1840 = vrot.slane %v1839, 2
    %v1841 = vadd.f32 %v1839, %v1840
    %v1842 = vrot.slane %v1841, 1
    %v1843 = vadd.f32 %v1841, %v1842
    %v1844 = vsel %vm810, %v1749, 0.0
    %v1845 = vsel %vm814, %v1750, 0.0
    %v1846 = vadd.f32 %v1844, %v1845
    %v1847 = vrot.slane %v1846, 4
    %v1848 = vadd.f32 %v1846, %v1847
    %v1849 = vrot.slane %v1848, 2
    %v1850 = vadd.f32 %v1848, %v1849
    %v1851 = vrot.slane %v1850, 1
    %v1852 = vadd.f32 %v1850, %v1851
    %v1853 = vsel %vm810, %v1751, 0.0
    %v1854 = vsel %vm814, %v1752, 0.0
    %v1855 = vadd.f32 %v1853, %v1854
    %v1856 = vrot.slane %v1855, 4
    %v1857 = vadd.f32 %v1855, %v1856
    %v1858 = vrot.slane %v1857, 2
    %v1859 = vadd.f32 %v1857, %v1858
    %v1860 = vrot.slane %v1859, 1
    %v1861 = vadd.f32 %v1859, %v1860
    %v1862 = vsel %vm810, %v1753, 0.0
    %v1863 = vsel %vm814, %v1754, 0.0
    %v1864 = vadd.f32 %v1862, %v1863
    %v1865 = vrot.slane %v1864, 4
    %v1866 = vadd.f32 %v1864, %v1865
    %v1867 = vrot.slane %v1866, 2
    %v1868 = vadd.f32 %v1866, %v1867
    %v1869 = vrot.slane %v1868, 1
    %v1870 = vadd.f32 %v1868, %v1869
    %v1871 = vsel %vm810, %v1755, 0.0
    %v1872 = vsel %vm814, %v1756, 0.0
    %v1873 = vadd.f32 %v1871, %v1872
    %v1874 = vrot.slane %v1873, 4
    %v1875 = vadd.f32 %v1873, %v1874
    %v1876 = vrot.slane %v1875, 2
    %v1877 = vadd.f32 %v1875, %v1876
    %v1878 = vrot.slane %v1877, 1
    %v1879 = vadd.f32 %v1877, %v1878
    %v1880 = vsel %vm810, %v1757, 0.0
    %v1881 = vsel %vm814, %v1758, 0.0
    %v1882 = vadd.f32 %v1880, %v1881
    %v1883 = vrot.slane %v1882, 4
    %v1884 = vadd.f32 %v1882, %v1883
    %v1885 = vrot.slane %v1884, 2
    %v1886 = vadd.f32 %v1884, %v1885
    %v1887 = vrot.slane %v1886, 1
    %v1888 = vadd.f32 %v1886, %v1887
    %v1889 = vsel %vm810, %v1759, 0.0
    %v1890 = vsel %vm814, %v1760, 0.0
    %v1891 = vadd.f32 %v1889, %v1890
    %v1892 = vrot.slane %v1891, 4
    %v1893 = vadd.f32 %v1891, %v1892
    %v1894 = vrot.slane %v1893, 2
    %v1895 = vadd.f32 %v1893, %v1894
    %v1896 = vrot.slane %v1895, 1
    %v1897 = vadd.f32 %v1895, %v1896
    %v1898 = vsel %vm810, %v1761, 0.0
    %v1899 = vsel %vm814, %v1762, 0.0
    %v1900 = vadd.f32 %v1898, %v1899
    %v1901 = vrot.slane %v1900, 4
    %v1902 = vadd.f32 %v1900, %v1901
    %v1903 = vrot.slane %v1902, 2
    %v1904 = vadd.f32 %v1902, %v1903
    %v1905 = vrot.slane %v1904, 1
    %v1906 = vadd.f32 %v1904, %v1905
    %v1907 = vld [vmem:[%s10] sm:$0xff]
    %v1908 = vld [vmem:[%s10 + $0x8] sm:$0xff]
    %v1909 = vld [vmem:[%s10 + $0x10] sm:$0xff]
    %v1910 = vld [vmem:[%s10 + $0x18] sm:$0xff]
    %v1911 = vld [vmem:[%s10 + $0x20] sm:$0xff]
    %v1912 = vld [vmem:[%s10 + $0x28] sm:$0xff]
    %v1913 = vld [vmem:[%s10 + $0x30] sm:$0xff]
    %v1914 = vld [vmem:[%s10 + $0x38] sm:$0xff]
    %v1915 = vld [vmem:[%s11 + $0xd] sm:$0x1]
    %v1916 = vlaneseq
    %v1917 = vshrl.u32 %v1916, 7
    %v1918 = vsub.s32 0, %v1917
    %v1919 = vrot.slane %v1915, %v1918
    %vm1936 = vcmask 1041409
    %v1937 = vsel %vm1936, %v1780, %v1771
    %vm1938 = vcmask 1042434
    %v1939 = vsel %vm1938, %v1789, %v1937
    %vm1940 = vcmask 1043459
    %v1941 = vsel %vm1940, %v1798, %v1939
    %vm1942 = vcmask 1044484
    %v1943 = vsel %vm1942, %v1807, %v1941
    %vm1944 = vcmask 1045509
    %v1945 = vsel %vm1944, %v1816, %v1943
    %vm1946 = vcmask 1046534
    %v1947 = vsel %vm1946, %v1825, %v1945
    %vm1948 = vcmask 1047559
    %v1949 = vsel %vm1948, %v1834, %v1947
    %v1950 = vsel %vm1936, %v1852, %v1843
    %v1951 = vsel %vm1938, %v1861, %v1950
    %v1952 = vsel %vm1940, %v1870, %v1951
    %v1953 = vsel %vm1942, %v1879, %v1952
    %v1954 = vsel %vm1944, %v1888, %v1953
    %v1955 = vsel %vm1946, %v1897, %v1954
    %v1956 = vsel %vm1948, %v1906, %v1955
    %1958 = vrot.lane.b32.xlu0 %v1919, 113
    %v1959 = vpop.permute.xlu0 %1958
    %v1961 = vsel %vm810, %v1949, 0
    %v1963 = vsel %vm810, %v1956, 0
    %1965 = vmatprep.subr.mxu0 0.0
    %1966 = vmatpush1.msra.mxu0 0.0
    %1967 = vmatprep.subr.mxu0 0.0
    %1968 = vmatpush1.msra.mxu0 0.0
    %1969 = vmatprep.subr.mxu0 0.0
    %1970 = vmatpush1.msra.mxu0 0.0
    %1971 = vmatprep.subr.mxu0 0.0
    %1972 = vmatpush1.msra.mxu0 0.0
    %1973 = vmatprep.subr.mxu0 0.0
    %1974 = vmatpush1.msra.mxu0 0.0
    %1975 = vmatprep.subr.mxu0 0.0
    %1976 = vmatpush1.msra.mxu0 0.0
    %1977 = vmatprep.subr.mxu0 0.0
    %1978 = vmatpush1.msra.mxu0 0.0
    %1979 = vmatprep.subr.mxu0 0.0
    %1980 = vmatpush1.msra.mxu0 0.0
    %1981 = vmatprep.subr.mxu0 0.0
    %1982 = vmatpush1.msra.mxu0 %v1914
    %1983 = vmatprep.subr.mxu0 0.0
    %1984 = vmatpush1.msra.mxu0 %v1913
    %1985 = vmatprep.subr.mxu0 0.0
    %1986 = vmatpush1.msra.mxu0 %v1912
    %1987 = vmatprep.subr.mxu0 0.0
    %1988 = vmatpush1.msra.mxu0 %v1911
    %1989 = vmatprep.subr.mxu0 0.0
    %1990 = vmatpush1.msra.mxu0 %v1910
    %1991 = vmatprep.subr.mxu0 0.0
    %1992 = vmatpush1.msra.mxu0 %v1909
    %1993 = vmatprep.subr.mxu0 0.0
    %1994 = vmatpush1.msra.mxu0 %v1908
    %1995 = vmatprep.subr.mxu0 0.0
    %1996 = vmatpush1.msra.mxu0 %v1907
    %1997 = vmatprep.subr.mxu0 0.0
    %1998 = vmatpush2.msra.mxu0 0.0
    %1999 = vmatprep.subr.mxu0 0.0
    %2000 = vmatpush2.msra.mxu0 0.0
    %2001 = vmatprep.subr.mxu0 0.0
    %2002 = vmatpush2.msra.mxu0 0.0
    %2003 = vmatprep.subr.mxu0 0.0
    %2004 = vmatpush2.msra.mxu0 0.0
    %2005 = vmatprep.subr.mxu0 0.0
    %2006 = vmatpush2.msra.mxu0 0.0
    %2007 = vmatprep.subr.mxu0 0.0
    %2008 = vmatpush2.msra.mxu0 0.0
    %2009 = vmatprep.subr.mxu0 0.0
    %2010 = vmatpush2.msra.mxu0 0.0
    %2011 = vmatprep.subr.mxu0 0.0
    %2012 = vmatpush2.msra.mxu0 0.0
    %2013 = vmatprep.subr.mxu0 0.0
    %2014 = vmatpush2.msra.mxu0 0.0
    %2015 = vmatprep.subr.mxu0 0.0
    %2016 = vmatpush2.msra.mxu0 0.0
    %2017 = vmatprep.subr.mxu0 0.0
    %2018 = vmatpush2.msra.mxu0 0.0
    %2019 = vmatprep.subr.mxu0 0.0
    %2020 = vmatpush2.msra.mxu0 0.0
    %2021 = vmatprep.subr.mxu0 0.0
    %2022 = vmatpush2.msra.mxu0 0.0
    %2023 = vmatprep.subr.mxu0 0.0
    %2024 = vmatpush2.msra.mxu0 0.0
    %2025 = vmatprep.subr.mxu0 0.0
    %2026 = vmatpush2.msra.mxu0 0.0
    %2027 = vmatprep.subr.mxu0 0.0
    %2028 = vmatpush2.msra.mxu0 0.0
    %2029 = vmatprep.mubr.f32.mxu0 0.0
    %2030 = vmatmul.mubr.f32.gmra.mxu0 %v1961
    %v2031 = vpop.f32.mrf.mxu0
    %v2032 = vadd.f32 %v1959, %v2031
    %v2033 = vpop.f32.mrf.mxu0
    %2034 = vmatprep.mubr.f32.mxu0 0.0
    %2035 = vmatmul.mubr.f32.gmra.mxu0 %v1963
    %v2036 = vpop.f32.mrf.mxu0
    %v2037 = vadd.f32 %v1959, %v2036
    %v2038 = vpop.f32.mrf.mxu0
    %2039 = vdwg.mxu0
    %v2040 = vmax.f32 %v2032, -1.0
    %v2041 = vmax.f32 %v2037, -1.0
    %v2042 = vmin.f32 %v2040, 1.0
    %v2043 = vmin.f32 %v2041, 1.0
    %vm2044 = vcmask 15360
    %2045 = vst.msk [vmem:[%s13] sm:$0xff] %vm2044, %v2042
    %2046 = vst.msk [vmem:[%s13 + $0x8] sm:$0xff] %vm2044, %v2043
    %v2047 = vadd.f32 %v2042, 0.999999
    %v2048 = vadd.f32 %v2043, 0.999999
    %v2049 = vmul.f32 %v2047, 4.0
    %v2050 = vmul.f32 %v2048, 4.0
    %v2051 = vcvt.f32.s32.to.zero.pseudo %v2049
    %v2052 = vcvt.f32.s32.to.zero.pseudo %v2050
    %v2053 = vmul.u32 %v2051, 8
    %v2054 = vmul.u32 %v2052, 8
    %2055 = vrot.lane.b32.xlu0 %v2051, 1
    %v2056 = vpop.permute.xlu0 %2055
    %2057 = vrot.lane.b32.xlu0 %v2052, 1
    %v2058 = vpop.permute.xlu0 %2057
    %v2059 = vadd.s32 %v2053, %v2056
    %v2060 = vadd.s32 %v2054, %v2058
    %v2061 = vlaneseq
    %v2062 = vand.u32 %v2061, 127
    %2063 = vset.pattern.permute.xlu0 1
    %2064 = vperm.xlu0 %2063, %v2059
    %v2065 = vpop.permute.xlu0 %2064
    %2066 = vset.pattern.permute.xlu0 1
    %2067 = vperm.xlu0 %2066, %v2060
    %v2068 = vpop.permute.xlu0 %2067
    %vm2069 = vcmp.eq.s32.totalorder %v2062, %v2065
    %vm2070 = vcmp.eq.s32.totalorder %v2062, %v2068
    %v2071 = vsel %vm2069, 1, 0
    %v2072 = vsel %vm2070, 1, 0
    %v2073 = vcvt.s32.f32 %v2071
    %v2074 = vcvt.s32.f32 %v2072
    %v2077 = vcombine.high %v2073, %v2073
    %v2079 = vunpack.c.l.s4 1966171168
    %v2080 = vunpack.c.0.s8 %v2079
    %v2081 = vlaneseq
    %v2082 = vshrl.u32 %v2081, 7
    %v2083 = vsub.s32 %v2080, %v2082
    %v2084 = vrot.slane %v2073, %v2083
    %v2086 = vunpack.c.l.s4 1966171168
    %v2087 = vunpack.c.0.s8 %v2086
    %v2088 = vlaneseq
    %v2089 = vshrl.u32 %v2088, 7
    %v2090 = vsub.s32 %v2087, %v2089
    %v2091 = vrot.slane %v2077, %v2090
    %v2092 = vcombine.high %v2084, %v2084
    %v2093 = vcombine.high %v2091, %v2091
    %v2095 = vunpack.c.l.s4 1966171168
    %v2096 = vunpack.c.0.s8 %v2095
    %v2097 = vlaneseq
    %v2098 = vshrl.u32 %v2097, 7
    %v2099 = vsub.s32 %v2096, %v2098
    %v2100 = vrot.slane %v2084, %v2099
    %v2102 = vunpack.c.l.s4 1966171168
    %v2103 = vunpack.c.0.s8 %v2102
    %v2104 = vlaneseq
    %v2105 = vshrl.u32 %v2104, 7
    %v2106 = vsub.s32 %v2103, %v2105
    %v2107 = vrot.slane %v2091, %v2106
    %v2109 = vunpack.c.l.s4 1966171168
    %v2110 = vunpack.c.0.s8 %v2109
    %v2111 = vlaneseq
    %v2112 = vshrl.u32 %v2111, 7
    %v2113 = vsub.s32 %v2110, %v2112
    %v2114 = vrot.slane %v2092, %v2113
    %v2116 = vunpack.c.l.s4 1966171168
    %v2117 = vunpack.c.0.s8 %v2116
    %v2118 = vlaneseq
    %v2119 = vshrl.u32 %v2118, 7
    %v2120 = vsub.s32 %v2117, %v2119
    %v2121 = vrot.slane %v2093, %v2120
    %v2122 = vcombine.high %v2100, %v2100
    %v2123 = vcombine.high %v2107, %v2107
    %v2124 = vcombine.high %v2114, %v2114
    %v2125 = vcombine.high %v2121, %v2121
    %v2126 = vcombine.high %v2074, %v2074
    %v2128 = vunpack.c.l.s4 1966171168
    %v2129 = vunpack.c.0.s8 %v2128
    %v2130 = vlaneseq
    %v2131 = vshrl.u32 %v2130, 7
    %v2132 = vsub.s32 %v2129, %v2131
    %v2133 = vrot.slane %v2074, %v2132
    %v2135 = vunpack.c.l.s4 1966171168
    %v2136 = vunpack.c.0.s8 %v2135
    %v2137 = vlaneseq
    %v2138 = vshrl.u32 %v2137, 7
    %v2139 = vsub.s32 %v2136, %v2138
    %v2140 = vrot.slane %v2126, %v2139
    %v2141 = vcombine.high %v2133, %v2133
    %v2142 = vcombine.high %v2140, %v2140
    %v2144 = vunpack.c.l.s4 1966171168
    %v2145 = vunpack.c.0.s8 %v2144
    %v2146 = vlaneseq
    %v2147 = vshrl.u32 %v2146, 7
    %v2148 = vsub.s32 %v2145, %v2147
    %v2149 = vrot.slane %v2133, %v2148
    %v2151 = vunpack.c.l.s4 1966171168
    %v2152 = vunpack.c.0.s8 %v2151
    %v2153 = vlaneseq
    %v2154 = vshrl.u32 %v2153, 7
    %v2155 = vsub.s32 %v2152, %v2154
    %v2156 = vrot.slane %v2140, %v2155
    %v2158 = vunpack.c.l.s4 1966171168
    %v2159 = vunpack.c.0.s8 %v2158
    %v2160 = vlaneseq
    %v2161 = vshrl.u32 %v2160, 7
    %v2162 = vsub.s32 %v2159, %v2161
    %v2163 = vrot.slane %v2141, %v2162
    %v2165 = vunpack.c.l.s4 1966171168
    %v2166 = vunpack.c.0.s8 %v2165
    %v2167 = vlaneseq
    %v2168 = vshrl.u32 %v2167, 7
    %v2169 = vsub.s32 %v2166, %v2168
    %v2170 = vrot.slane %v2142, %v2169
    %v2171 = vcombine.high %v2149, %v2149
    %v2172 = vcombine.high %v2156, %v2156
    %v2173 = vcombine.high %v2163, %v2163
    %v2174 = vcombine.high %v2170, %v2170
    %v2175 = vlaneseq
    %v2176 = vshrl.u32 %v2175, 7
    %v2177 = vsub.s32 0, %v2176
    %v2178 = vrot.slane %v2100, %v2177
    %v2179 = vlaneseq
    %v2180 = vshrl.u32 %v2179, 7
    %v2181 = vsub.s32 0, %v2180
    %v2182 = vrot.slane %v2114, %v2181
    %v2183 = vlaneseq
    %v2184 = vshrl.u32 %v2183, 7
    %v2185 = vsub.s32 0, %v2184
    %v2186 = vrot.slane %v2122, %v2185
    %v2187 = vlaneseq
    %v2188 = vshrl.u32 %v2187, 7
    %v2189 = vsub.s32 0, %v2188
    %v2190 = vrot.slane %v2124, %v2189
    %v2191 = vlaneseq
    %v2192 = vshrl.u32 %v2191, 7
    %v2193 = vsub.s32 0, %v2192
    %v2194 = vrot.slane %v2107, %v2193
    %v2195 = vlaneseq
    %v2196 = vshrl.u32 %v2195, 7
    %v2197 = vsub.s32 0, %v2196
    %v2198 = vrot.slane %v2121, %v2197
    %v2199 = vlaneseq
    %v2200 = vshrl.u32 %v2199, 7
    %v2201 = vsub.s32 0, %v2200
    %v2202 = vrot.slane %v2123, %v2201
    %v2203 = vlaneseq
    %v2204 = vshrl.u32 %v2203, 7
    %v2205 = vsub.s32 0, %v2204
    %v2206 = vrot.slane %v2125, %v2205
    %v2207 = vlaneseq
    %v2208 = vshrl.u32 %v2207, 7
    %v2209 = vsub.s32 0, %v2208
    %v2210 = vrot.slane %v2149, %v2209
    %v2211 = vlaneseq
    %v2212 = vshrl.u32 %v2211, 7
    %v2213 = vsub.s32 0, %v2212
    %v2214 = vrot.slane %v2163, %v2213
    %v2215 = vlaneseq
    %v2216 = vshrl.u32 %v2215, 7
    %v2217 = vsub.s32 0, %v2216
    %v2218 = vrot.slane %v2171, %v2217
    %v2219 = vlaneseq
    %v2220 = vshrl.u32 %v2219, 7
    %v2221 = vsub.s32 0, %v2220
    %v2222 = vrot.slane %v2173, %v2221
    %v2223 = vlaneseq
    %v2224 = vshrl.u32 %v2223, 7
    %v2225 = vsub.s32 0, %v2224
    %v2226 = vrot.slane %v2156, %v2225
    %v2227 = vlaneseq
    %v2228 = vshrl.u32 %v2227, 7
    %v2229 = vsub.s32 0, %v2228
    %v2230 = vrot.slane %v2170, %v2229
    %v2231 = vlaneseq
    %v2232 = vshrl.u32 %v2231, 7
    %v2233 = vsub.s32 0, %v2232
    %v2234 = vrot.slane %v2172, %v2233
    %v2235 = vlaneseq
    %v2236 = vshrl.u32 %v2235, 7
    %v2237 = vsub.s32 0, %v2236
    %v2238 = vrot.slane %v2174, %v2237
    %v2255 = vmul.f32 %v1731, %v2178
    %v2256 = vmul.f32 %v1732, %v2178
    %v2257 = vmul.f32 %v1733, %v2182
    %v2258 = vmul.f32 %v1734, %v2182
    %v2259 = vmul.f32 %v1735, %v2186
    %v2260 = vmul.f32 %v1736, %v2186
    %v2261 = vmul.f32 %v1737, %v2190
    %v2262 = vmul.f32 %v1738, %v2190
    %v2263 = vmul.f32 %v1739, %v2194
    %v2264 = vmul.f32 %v1740, %v2194
    %v2265 = vmul.f32 %v1741, %v2198
    %v2266 = vmul.f32 %v1742, %v2198
    %v2267 = vmul.f32 %v1743, %v2202
    %v2268 = vmul.f32 %v1744, %v2202
    %v2269 = vmul.f32 %v1745, %v2206
    %v2270 = vmul.f32 %v1746, %v2206
    %v2271 = vmul.f32 %v1731, %v2210
    %v2272 = vmul.f32 %v1732, %v2210
    %v2273 = vmul.f32 %v1733, %v2214
    %v2274 = vmul.f32 %v1734, %v2214
    %v2275 = vmul.f32 %v1735, %v2218
    %v2276 = vmul.f32 %v1736, %v2218
    %v2277 = vmul.f32 %v1737, %v2222
    %v2278 = vmul.f32 %v1738, %v2222
    %v2279 = vmul.f32 %v1739, %v2226
    %v2280 = vmul.f32 %v1740, %v2226
    %v2281 = vmul.f32 %v1741, %v2230
    %v2282 = vmul.f32 %v1742, %v2230
    %v2283 = vmul.f32 %v1743, %v2234
    %v2284 = vmul.f32 %v1744, %v2234
    %v2285 = vmul.f32 %v1745, %v2238
    %v2286 = vmul.f32 %v1746, %v2238
    %v2287 = vsel %vm810, %v2255, 0.0
    %2288 = vadd.xlane.f32.xlu0 %v2287
    %v2289 = vpop.xlane.xlu0 %2288
    %v2290 = vsel %vm814, %v2256, 0.0
    %2291 = vadd.xlane.f32.xlu0 %v2290
    %v2292 = vpop.xlane.xlu0 %2291
    %v2293 = vsel %vm810, %v2257, 0.0
    %2294 = vadd.xlane.f32.xlu0 %v2293
    %v2295 = vpop.xlane.xlu0 %2294
    %v2296 = vsel %vm814, %v2258, 0.0
    %2297 = vadd.xlane.f32.xlu0 %v2296
    %v2298 = vpop.xlane.xlu0 %2297
    %v2299 = vsel %vm810, %v2259, 0.0
    %2300 = vadd.xlane.f32.xlu0 %v2299
    %v2301 = vpop.xlane.xlu0 %2300
    %v2302 = vsel %vm814, %v2260, 0.0
    %2303 = vadd.xlane.f32.xlu0 %v2302
    %v2304 = vpop.xlane.xlu0 %2303
    %v2305 = vsel %vm810, %v2261, 0.0
    %2306 = vadd.xlane.f32.xlu0 %v2305
    %v2307 = vpop.xlane.xlu0 %2306
    %v2308 = vsel %vm814, %v2262, 0.0
    %2309 = vadd.xlane.f32.xlu0 %v2308
    %v2310 = vpop.xlane.xlu0 %2309
    %v2311 = vsel %vm810, %v2263, 0.0
    %2312 = vadd.xlane.f32.xlu0 %v2311
    %v2313 = vpop.xlane.xlu0 %2312
    %v2314 = vsel %vm814, %v2264, 0.0
    %2315 = vadd.xlane.f32.xlu0 %v2314
    %v2316 = vpop.xlane.xlu0 %2315
    %v2317 = vsel %vm810, %v2265, 0.0
    %2318 = vadd.xlane.f32.xlu0 %v2317
    %v2319 = vpop.xlane.xlu0 %2318
    %v2320 = vsel %vm814, %v2266, 0.0
    %2321 = vadd.xlane.f32.xlu0 %v2320
    %v2322 = vpop.xlane.xlu0 %2321
    %v2323 = vsel %vm810, %v2267, 0.0
    %2324 = vadd.xlane.f32.xlu0 %v2323
    %v2325 = vpop.xlane.xlu0 %2324
    %v2326 = vsel %vm814, %v2268, 0.0
    %2327 = vadd.xlane.f32.xlu0 %v2326
    %v2328 = vpop.xlane.xlu0 %2327
    %v2329 = vsel %vm810, %v2269, 0.0
    %2330 = vadd.xlane.f32.xlu0 %v2329
    %v2331 = vpop.xlane.xlu0 %2330
    %v2332 = vsel %vm814, %v2270, 0.0
    %2333 = vadd.xlane.f32.xlu0 %v2332
    %v2334 = vpop.xlane.xlu0 %2333
    %v2335 = vsel %vm810, %v2271, 0.0
    %2336 = vadd.xlane.f32.xlu0 %v2335
    %v2337 = vpop.xlane.xlu0 %2336
    %v2338 = vsel %vm814, %v2272, 0.0
    %2339 = vadd.xlane.f32.xlu0 %v2338
    %v2340 = vpop.xlane.xlu0 %2339
    %v2341 = vsel %vm810, %v2273, 0.0
    %2342 = vadd.xlane.f32.xlu0 %v2341
    %v2343 = vpop.xlane.xlu0 %2342
    %v2344 = vsel %vm814, %v2274, 0.0
    %2345 = vadd.xlane.f32.xlu0 %v2344
    %v2346 = vpop.xlane.xlu0 %2345
    %v2347 = vsel %vm810, %v2275, 0.0
    %2348 = vadd.xlane.f32.xlu0 %v2347
    %v2349 = vpop.xlane.xlu0 %2348
    %v2350 = vsel %vm814, %v2276, 0.0
    %2351 = vadd.xlane.f32.xlu0 %v2350
    %v2352 = vpop.xlane.xlu0 %2351
    %v2353 = vsel %vm810, %v2277, 0.0
    %2354 = vadd.xlane.f32.xlu0 %v2353
    %v2355 = vpop.xlane.xlu0 %2354
    %v2356 = vsel %vm814, %v2278, 0.0
    %2357 = vadd.xlane.f32.xlu0 %v2356
    %v2358 = vpop.xlane.xlu0 %2357
    %v2359 = vsel %vm810, %v2279, 0.0
    %2360 = vadd.xlane.f32.xlu0 %v2359
    %v2361 = vpop.xlane.xlu0 %2360
    %v2362 = vsel %vm814, %v2280, 0.0
    %2363 = vadd.xlane.f32.xlu0 %v2362
    %v2364 = vpop.xlane.xlu0 %2363
    %v2365 = vsel %vm810, %v2281, 0.0
    %2366 = vadd.xlane.f32.xlu0 %v2365
    %v2367 = vpop.xlane.xlu0 %2366
    %v2368 = vsel %vm814, %v2282, 0.0
    %2369 = vadd.xlane.f32.xlu0 %v2368
    %v2370 = vpop.xlane.xlu0 %2369
    %v2371 = vsel %vm810, %v2283, 0.0
    %2372 = vadd.xlane.f32.xlu0 %v2371
    %v2373 = vpop.xlane.xlu0 %2372
    %v2374 = vsel %vm814, %v2284, 0.0
    %2375 = vadd.xlane.f32.xlu0 %v2374
    %v2376 = vpop.xlane.xlu0 %2375
    %v2377 = vsel %vm810, %v2285, 0.0
    %2378 = vadd.xlane.f32.xlu0 %v2377
    %v2379 = vpop.xlane.xlu0 %2378
    %v2380 = vsel %vm814, %v2286, 0.0
    %2381 = vadd.xlane.f32.xlu0 %v2380
    %v2382 = vpop.xlane.xlu0 %2381
    %v2383 = vsel %vm941, %v2292, inf
    %v2384 = vsel %vm941, %v2298, inf
    %v2385 = vmin.f32 %v2289, %v2301
    %v2386 = vsel %vm941, %v2304, inf
    %v2387 = vmin.f32 %v2383, %v2386
    %v2388 = vmin.f32 %v2295, %v2307
    %v2389 = vsel %vm941, %v2310, inf
    %v2390 = vmin.f32 %v2384, %v2389
    %v2391 = vmin.f32 %v2385, %v2313
    %v2392 = vsel %vm941, %v2316, inf
    %v2393 = vmin.f32 %v2387, %v2392
    %v2394 = vmin.f32 %v2388, %v2319
    %v2395 = vsel %vm941, %v2322, inf
    %v2396 = vmin.f32 %v2390, %v2395
    %v2397 = vmin.f32 %v2391, %v2325
    %v2398 = vsel %vm941, %v2328, inf
    %v2399 = vmin.f32 %v2393, %v2398
    %v2400 = vmin.f32 %v2394, %v2331
    %v2401 = vsel %vm941, %v2334, inf
    %v2402 = vmin.f32 %v2396, %v2401
    %v2403 = vmin.f32 %v2397, %v2337
    %v2404 = vsel %vm941, %v2340, inf
    %v2405 = vmin.f32 %v2399, %v2404
    %v2406 = vmin.f32 %v2400, %v2343
    %v2407 = vsel %vm941, %v2346, inf
    %v2408 = vmin.f32 %v2402, %v2407
    %v2409 = vmin.f32 %v2403, %v2349
    %v2410 = vsel %vm941, %v2352, inf
    %v2411 = vmin.f32 %v2405, %v2410
    %v2412 = vmin.f32 %v2406, %v2355
    %v2413 = vsel %vm941, %v2358, inf
    %v2414 = vmin.f32 %v2408, %v2413
    %v2415 = vmin.f32 %v2409, %v2361
    %v2416 = vsel %vm941, %v2364, inf
    %v2417 = vmin.f32 %v2411, %v2416
    %v2418 = vmin.f32 %v2412, %v2367
    %v2419 = vsel %vm941, %v2370, inf
    %v2420 = vmin.f32 %v2414, %v2419
    %v2421 = vmin.f32 %v2415, %v2373
    %v2422 = vsel %vm941, %v2376, inf
    %v2423 = vmin.f32 %v2417, %v2422
    %v2424 = vmin.f32 %v2418, %v2379
    %v2425 = vsel %vm941, %v2382, inf
    %v2426 = vmin.f32 %v2420, %v2425
    %v2427 = vmin.f32 %v2421, %v2423
    %v2428 = vmin.f32 %v2424, %v2426
    %v2429 = vmin.f32 %v2427, %v2428
    %v2430 = vrot.slane %v2429, 4
    %v2431 = vmin.f32 %v2429, %v2430
    %v2432 = vrot.slane %v2431, 2
    %v2433 = vmin.f32 %v2431, %v2432
    %v2434 = vrot.slane %v2433, 1
    %v2435 = vmin.f32 %v2433, %v2434
    %s2436 = vtos %v2435
    %v2437 = vstv %s2436
    %v2438 = vsub.f32 %v2289, %v2437
    %v2439 = vsub.f32 %v2292, %v2437
    %v2440 = vsub.f32 %v2295, %v2437
    %v2441 = vsub.f32 %v2298, %v2437
    %v2442 = vsub.f32 %v2301, %v2437
    %v2443 = vsub.f32 %v2304, %v2437
    %v2444 = vsub.f32 %v2307, %v2437
    %v2445 = vsub.f32 %v2310, %v2437
    %v2446 = vsub.f32 %v2313, %v2437
    %v2447 = vsub.f32 %v2316, %v2437
    %v2448 = vsub.f32 %v2319, %v2437
    %v2449 = vsub.f32 %v2322, %v2437
    %v2450 = vsub.f32 %v2325, %v2437
    %v2451 = vsub.f32 %v2328, %v2437
    %v2452 = vsub.f32 %v2331, %v2437
    %v2453 = vsub.f32 %v2334, %v2437
    %v2454 = vsub.f32 %v2337, %v2437
    %v2455 = vsub.f32 %v2340, %v2437
    %v2456 = vsub.f32 %v2343, %v2437
    %v2457 = vsub.f32 %v2346, %v2437
    %v2458 = vsub.f32 %v2349, %v2437
    %v2459 = vsub.f32 %v2352, %v2437
    %v2460 = vsub.f32 %v2355, %v2437
    %v2461 = vsub.f32 %v2358, %v2437
    %v2462 = vsub.f32 %v2361, %v2437
    %v2463 = vsub.f32 %v2364, %v2437
    %v2464 = vsub.f32 %v2367, %v2437
    %v2465 = vsub.f32 %v2370, %v2437
    %v2466 = vsub.f32 %v2373, %v2437
    %v2467 = vsub.f32 %v2376, %v2437
    %v2468 = vsub.f32 %v2379, %v2437
    %v2469 = vsub.f32 %v2382, %v2437
    %v2502 = vlaneseq
    %v2503 = vshrl.u32 %v2502, 7
    %v2504 = vsub.s32 %v2062, %v2503
    %v2505 = vrot.slane %v2438, %v2504
    %v2506 = vadd.s32 %v2062, 4294967288
    %v2507 = vlaneseq
    %v2508 = vshrl.u32 %v2507, 7
    %v2509 = vsub.s32 %v2506, %v2508
    %v2510 = vrot.slane %v2439, %v2509
    %vm2511 = vcmask 130112
    %v2512 = vsel %vm2511, %v2510, %v2505
    %v2513 = vlaneseq
    %v2514 = vshrl.u32 %v2513, 7
    %v2515 = vsub.s32 %v2062, %v2514
    %v2516 = vrot.slane %v2440, %v2515
    %v2517 = vlaneseq
    %v2518 = vshrl.u32 %v2517, 7
    %v2519 = vsub.s32 %v2506, %v2518
    %v2520 = vrot.slane %v2441, %v2519
    %v2521 = vsel %vm2511, %v2520, %v2516
    %v2522 = vlaneseq
    %v2523 = vshrl.u32 %v2522, 7
    %v2524 = vsub.s32 %v2062, %v2523
    %v2525 = vrot.slane %v2442, %v2524
    %v2526 = vlaneseq
    %v2527 = vshrl.u32 %v2526, 7
    %v2528 = vsub.s32 %v2506, %v2527
    %v2529 = vrot.slane %v2443, %v2528
    %v2530 = vsel %vm2511, %v2529, %v2525
    %v2531 = vlaneseq
    %v2532 = vshrl.u32 %v2531, 7
    %v2533 = vsub.s32 %v2062, %v2532
    %v2534 = vrot.slane %v2444, %v2533
    %v2535 = vlaneseq
    %v2536 = vshrl.u32 %v2535, 7
    %v2537 = vsub.s32 %v2506, %v2536
    %v2538 = vrot.slane %v2445, %v2537
    %v2539 = vsel %vm2511, %v2538, %v2534
    %v2540 = vlaneseq
    %v2541 = vshrl.u32 %v2540, 7
    %v2542 = vsub.s32 %v2062, %v2541
    %v2543 = vrot.slane %v2446, %v2542
    %v2544 = vlaneseq
    %v2545 = vshrl.u32 %v2544, 7
    %v2546 = vsub.s32 %v2506, %v2545
    %v2547 = vrot.slane %v2447, %v2546
    %v2548 = vsel %vm2511, %v2547, %v2543
    %v2549 = vlaneseq
    %v2550 = vshrl.u32 %v2549, 7
    %v2551 = vsub.s32 %v2062, %v2550
    %v2552 = vrot.slane %v2448, %v2551
    %v2553 = vlaneseq
    %v2554 = vshrl.u32 %v2553, 7
    %v2555 = vsub.s32 %v2506, %v2554
    %v2556 = vrot.slane %v2449, %v2555
    %v2557 = vsel %vm2511, %v2556, %v2552
    %v2558 = vlaneseq
    %v2559 = vshrl.u32 %v2558, 7
    %v2560 = vsub.s32 %v2062, %v2559
    %v2561 = vrot.slane %v2450, %v2560
    %v2562 = vlaneseq
    %v2563 = vshrl.u32 %v2562, 7
    %v2564 = vsub.s32 %v2506, %v2563
    %v2565 = vrot.slane %v2451, %v2564
    %v2566 = vsel %vm2511, %v2565, %v2561
    %v2567 = vlaneseq
    %v2568 = vshrl.u32 %v2567, 7
    %v2569 = vsub.s32 %v2062, %v2568
    %v2570 = vrot.slane %v2452, %v2569
    %v2571 = vlaneseq
    %v2572 = vshrl.u32 %v2571, 7
    %v2573 = vsub.s32 %v2506, %v2572
    %v2574 = vrot.slane %v2453, %v2573
    %v2575 = vsel %vm2511, %v2574, %v2570
    %v2576 = vlaneseq
    %v2577 = vshrl.u32 %v2576, 7
    %v2578 = vsub.s32 %v2062, %v2577
    %v2579 = vrot.slane %v2454, %v2578
    %v2580 = vlaneseq
    %v2581 = vshrl.u32 %v2580, 7
    %v2582 = vsub.s32 %v2506, %v2581
    %v2583 = vrot.slane %v2455, %v2582
    %v2584 = vsel %vm2511, %v2583, %v2579
    %v2585 = vlaneseq
    %v2586 = vshrl.u32 %v2585, 7
    %v2587 = vsub.s32 %v2062, %v2586
    %v2588 = vrot.slane %v2456, %v2587
    %v2589 = vlaneseq
    %v2590 = vshrl.u32 %v2589, 7
    %v2591 = vsub.s32 %v2506, %v2590
    %v2592 = vrot.slane %v2457, %v2591
    %v2593 = vsel %vm2511, %v2592, %v2588
    %v2594 = vlaneseq
    %v2595 = vshrl.u32 %v2594, 7
    %v2596 = vsub.s32 %v2062, %v2595
    %v2597 = vrot.slane %v2458, %v2596
    %v2598 = vlaneseq
    %v2599 = vshrl.u32 %v2598, 7
    %v2600 = vsub.s32 %v2506, %v2599
    %v2601 = vrot.slane %v2459, %v2600
    %v2602 = vsel %vm2511, %v2601, %v2597
    %v2603 = vlaneseq
    %v2604 = vshrl.u32 %v2603, 7
    %v2605 = vsub.s32 %v2062, %v2604
    %v2606 = vrot.slane %v2460, %v2605
    %v2607 = vlaneseq
    %v2608 = vshrl.u32 %v2607, 7
    %v2609 = vsub.s32 %v2506, %v2608
    %v2610 = vrot.slane %v2461, %v2609
    %v2611 = vsel %vm2511, %v2610, %v2606
    %v2612 = vlaneseq
    %v2613 = vshrl.u32 %v2612, 7
    %v2614 = vsub.s32 %v2062, %v2613
    %v2615 = vrot.slane %v2462, %v2614
    %v2616 = vlaneseq
    %v2617 = vshrl.u32 %v2616, 7
    %v2618 = vsub.s32 %v2506, %v2617
    %v2619 = vrot.slane %v2463, %v2618
    %v2620 = vsel %vm2511, %v2619, %v2615
    %v2621 = vlaneseq
    %v2622 = vshrl.u32 %v2621, 7
    %v2623 = vsub.s32 %v2062, %v2622
    %v2624 = vrot.slane %v2464, %v2623
    %v2625 = vlaneseq
    %v2626 = vshrl.u32 %v2625, 7
    %v2627 = vsub.s32 %v2506, %v2626
    %v2628 = vrot.slane %v2465, %v2627
    %v2629 = vsel %vm2511, %v2628, %v2624
    %v2630 = vlaneseq
    %v2631 = vshrl.u32 %v2630, 7
    %v2632 = vsub.s32 %v2062, %v2631
    %v2633 = vrot.slane %v2466, %v2632
    %v2634 = vlaneseq
    %v2635 = vshrl.u32 %v2634, 7
    %v2636 = vsub.s32 %v2506, %v2635
    %v2637 = vrot.slane %v2467, %v2636
    %v2638 = vsel %vm2511, %v2637, %v2633
    %v2639 = vlaneseq
    %v2640 = vshrl.u32 %v2639, 7
    %v2641 = vsub.s32 %v2062, %v2640
    %v2642 = vrot.slane %v2468, %v2641
    %v2643 = vlaneseq
    %v2644 = vshrl.u32 %v2643, 7
    %v2645 = vsub.s32 %v2506, %v2644
    %v2646 = vrot.slane %v2469, %v2645
    %v2647 = vsel %vm2511, %v2646, %v2642
    %v2648 = vsel %vm1936, %v2521, %v2512
    %v2649 = vsel %vm1938, %v2530, %v2648
    %v2650 = vsel %vm1940, %v2539, %v2649
    %v2651 = vsel %vm1942, %v2548, %v2650
    %v2652 = vsel %vm1944, %v2557, %v2651
    %v2653 = vsel %vm1946, %v2566, %v2652
    %v2654 = vsel %vm1948, %v2575, %v2653
    %v2655 = vsel %vm1936, %v2593, %v2584
    %v2656 = vsel %vm1938, %v2602, %v2655
    %v2657 = vsel %vm1940, %v2611, %v2656
    %v2658 = vsel %vm1942, %v2620, %v2657
    %v2659 = vsel %vm1944, %v2629, %v2658
    %v2660 = vsel %vm1946, %v2638, %v2659
    %v2661 = vsel %vm1948, %v2647, %v2660
    %2664 = vst.msk [vmem:[#allocation5] sm:$0xff] %vm755, %v2654
    %2665 = vst.msk [vmem:[#allocation5 + $0x8] sm:$0xff] %vm755, %v2661
    // Predicated region
    $region54: #{amtgaf_forward.1} parent=1 // pred_check
      _
    $region55: #{amtgaf_forward.1} parent=1 // pred_check_branch
      %2667 = sbr.rel (0) target = $region57
    $region56: #{amtgaf_forward.1} parent=1 // pred_region
      _
    $region57: #{amtgaf_forward.1} parent=1 // pred_fallthru
      _
    // Predicated region
    $region58: #{amtgaf_forward.1} parent=1 // pred_check
      _
    $region59: #{amtgaf_forward.1} parent=1 // pred_check_branch
      %2669 = sbr.rel (0) target = $region61
    $region60: #{amtgaf_forward.1} parent=1 // pred_region
      _
    $region61: #{amtgaf_forward.1} parent=1 // pred_fallthru
      _
    // Predicated region
    $region62: #{amtgaf_forward.1} parent=1 // pred_check
      _
    $region63: #{amtgaf_forward.1} parent=1 // pred_check_branch
      %2671 = sbr.rel (0) target = $region65
    $region64: #{amtgaf_forward.1} parent=1 // pred_region
      %s2673 = ssub.s32 256, 256
      %2674 = vsyncadd [#allocation3], %s2673
      %s2675 = sshll.u32 [#allocation5], 4
      %s2676 = int_to_ptr.vmem [resolvable:$true] %s2675
      %2681 = dma.vmem_to_hbm [thread:$0]  %s2676, 256, %s14, [#allocation3], 128, 128, 8
    $region65: #{amtgaf_forward.1} parent=1 // pred_fallthru
      _
    // Predicated region
    $region66: #{amtgaf_forward.1} parent=1 // pred_check
      _
    $region67: #{amtgaf_forward.1} parent=1 // pred_check_branch
      %2683 = sbr.rel (0) target = $region69
    $region68: #{amtgaf_forward.1} parent=1 // pred_region
      _
    $region69: #{amtgaf_forward.1} parent=1 // pred_fallthru
      _
    // Predicated region
    $region70: #{amtgaf_forward.1} parent=1 // pred_check
      _
    $region71: #{amtgaf_forward.1} parent=1 // pred_check_branch
      %2685 = sbr.rel (0) target = $region73
    $region72: #{amtgaf_forward.1} parent=1 // pred_region
      _
    $region73: #{amtgaf_forward.1} parent=1 // pred_fallthru
      _
    // Predicated region
    $region74: #{amtgaf_forward.1} parent=1 // pred_check
      _
    $region75: #{amtgaf_forward.1} parent=1 // pred_check_branch
      %2687 = sbr.rel (0) target = $region77
    $region76: #{amtgaf_forward.1} parent=1 // pred_region
      %2688 = dma.done [#allocation3], 256
    $region77: #{amtgaf_forward.1} parent=1 // pred_fallthru
      _
    %2689 = vsyncpa [#allocation3], 1
    %2690 = vsyncpa [#allocation4], 1

</llo_original>
